<compile_context>
chip_gen: v6e
topology: v6e:2x2x1
jax: 0.10.0
libtpu: 0.0.40
codegen_flags: <defaults>
</compile_context>

<pallas_src>
import functools

import jax
import jax.numpy as jnp
from jax.experimental import pallas as pl
from jax.experimental.pallas import tpu as pltpu

LANE = 128
_VMEM_LIMIT = 48 * 1024 * 1024  # scoped-VMEM budget: fits v7x 64 MiB/TC, ample on v5e/v6e


def _round_up(x, m):
    return (x + m - 1) // m * m


def _pad2(a, rows, cols):
    return jnp.pad(a, ((0, rows - a.shape[0]), (0, cols - a.shape[1])))


# ----------------------------- Pallas kernels -----------------------------

def conv_relu_kernel(a_ref, dinv_ref, xs_ref, xr_ref, wl_ref, wr_ref, b_ref,
                     o_ref, acc_ref):
    """SAGEConv(aggr='mean') + ReLU, tiled over (dst rows, src blocks).

    acc[row_tile]  = sum_k count[row, k] @ X[k]           (int8 counts -> bf16 MXU, f32 acc)
    out[row_tile]  = ReLU( (deg_inv * acc) @ W_l + X[row] @ W_r + b )
    """
    k = pl.program_id(1)

    @pl.when(k == 0)
    def _init():
        acc_ref[...] = jnp.zeros_like(acc_ref)

    # int8 edge counts -> bf16 (exact for small integers); cast hidden under DMA.
    a_bf16 = a_ref[...].astype(jnp.float32).astype(jnp.bfloat16)
    acc_ref[...] += jnp.dot(a_bf16, xs_ref[...],
                            preferred_element_type=jnp.float32)

    @pl.when(k == pl.num_programs(1) - 1)
    def _finalize():
        agg = acc_ref[...] * dinv_ref[...]          # f32 mean normalization
        out = (jnp.dot(agg.astype(jnp.bfloat16), wl_ref[...],
                       preferred_element_type=jnp.float32)
               + jnp.dot(xr_ref[...], wr_ref[...],
                         preferred_element_type=jnp.float32)
               + b_ref[...])
        o_ref[...] = jnp.maximum(out, 0.0).astype(o_ref.dtype)


def conv_relu_mlp_kernel(a_ref, dinv_ref, hs_ref, hr_ref, wl_ref, wr_ref, b_ref,
                         wm_ref, bm_ref, wo_ref, bo_ref, o_ref, acc_ref,
                         *, num_mlp_layers):
    """Last SAGEConv + ReLU fused with the whole MLP classifier + sigmoid."""
    k = pl.program_id(1)

    @pl.when(k == 0)
    def _init():
        acc_ref[...] = jnp.zeros_like(acc_ref)

    a_bf16 = a_ref[...].astype(jnp.float32).astype(jnp.bfloat16)
    acc_ref[...] += jnp.dot(a_bf16, hs_ref[...],
                            preferred_element_type=jnp.float32)

    @pl.when(k == pl.num_programs(1) - 1)
    def _finalize():
        agg = acc_ref[...] * dinv_ref[...]          # f32 mean normalization
        h = (jnp.dot(agg.astype(jnp.bfloat16), wl_ref[...],
                     preferred_element_type=jnp.float32)
             + jnp.dot(hr_ref[...], wr_ref[...],
                       preferred_element_type=jnp.float32)
             + b_ref[...])
        y = jnp.maximum(h, 0.0)
        # MLP hidden layers (weights stacked, VMEM-resident, statically unrolled)
        for l in range(num_mlp_layers):
            y = (jnp.dot(y.astype(jnp.bfloat16), wm_ref[l],
                         preferred_element_type=jnp.float32) + bm_ref[l])
            y = jnp.maximum(y, 0.0)
        # output head + sigmoid: divide rides the EUP slot (approx reciprocal),
        # clamped to [0,1] to keep the probability-range invariant exact.
        y = (jnp.dot(y.astype(jnp.bfloat16), wo_ref[...],
                     preferred_element_type=jnp.float32) + bo_ref[...])
        sig = pl.reciprocal(1.0 + jnp.exp(-y), approx=True)
        o_ref[...] = jnp.clip(sig, 0.0, 1.0)


# ----------------------------- BlockSpec helpers ----------------------------

def _a_spec(tm, tk, k_blocks):
    # Deeper buffering on the dominant N^2 streaming input when the reduction
    # loop is long enough to make it useful (keeps DMA engines saturated at
    # v7x's 3.2 TB/s without exposing the finalize epilogue).
    if k_blocks >= 3:
        return pl.BlockSpec((tm, tk), lambda i, k: (i, k),
                            pipeline_mode=pl.Buffered(3))
    return pl.BlockSpec((tm, tk), lambda i, k: (i, k))


def _src_spec(tk, f, k_blocks):
    if k_blocks >= 3:
        return pl.BlockSpec((tk, f), lambda i, k: (k, 0),
                            pipeline_mode=pl.Buffered(3))
    return pl.BlockSpec((tk, f), lambda i, k: (k, 0))


# ----------------------------- wrappers ------------------------------------

def sage_conv_relu(a_cnt, deg_inv, x, w_l, w_r, b, *, tm, tk):
    n = a_cnt.shape[0]
    f = x.shape[1]
    hd = w_l.shape[1]
    grid = (n // tm, n // tk)
    cost = pl.CostEstimate(
        flops=int(2 * n * n * f + 4 * n * f * hd),
        transcendentals=0,
        bytes_accessed=int(n * n                      # int8 counts, read once
                           + grid[0] * n * f * 2      # X src blocks, re-read per row tile
                           + n * f * 2                # X row blocks
                           + 2 * f * hd * 2 + hd * 4  # weights + bias
                           + n * 4                    # deg_inv
                           + n * hd * 2))             # output
    return pl.pallas_call(
        conv_relu_kernel,
        out_shape=jax.ShapeDtypeStruct((n, hd), jnp.bfloat16),
        grid_spec=pltpu.PrefetchScalarGridSpec(
            num_scalar_prefetch=0, grid=grid,
            in_specs=[_a_spec(tm, tk, grid[1]),                        # edge counts (int8)
                      pl.BlockSpec((tm, 1), lambda i, k: (i, 0)),      # 1/deg (f32)
                      _src_spec(tk, f, grid[1]),                       # X src block
                      pl.BlockSpec((tm, f), lambda i, k: (i, 0)),      # X row block
                      pl.BlockSpec((f, hd), lambda i, k: (0, 0)),      # W_l
                      pl.BlockSpec((f, hd), lambda i, k: (0, 0)),      # W_r
                      pl.BlockSpec((1, hd), lambda i, k: (0, 0))],     # bias
            out_specs=pl.BlockSpec((tm, hd), lambda i, k: (i, 0)),
            scratch_shapes=[pltpu.VMEM((tm, f), jnp.float32)]),
        compiler_params=pltpu.CompilerParams(
            dimension_semantics=("parallel", "arbitrary"),
            vmem_limit_bytes=_VMEM_LIMIT),
        cost_estimate=cost,
    )(a_cnt, deg_inv, x, x, w_l, w_r, b)


def sage_conv_relu_mlp(a_cnt, deg_inv, h, w_l, w_r, b, mlp_w, mlp_b, out_w, out_b,
                       *, tm, tk, num_mlp_layers):
    n = a_cnt.shape[0]
    f = h.shape[1]
    hd = w_l.shape[1]
    od = out_w.shape[1]
    nl = mlp_w.shape[0]
    grid = (n // tm, n // tk)
    cost = pl.CostEstimate(
        flops=int(2 * n * n * f + 4 * n * f * hd
                  + 2 * n * hd * hd * num_mlp_layers + 2 * n * hd * od),
        transcendentals=int(n * od),
        bytes_accessed=int(n * n
                           + grid[0] * n * f * 2
                           + n * f * 2
                           + (2 * f * hd + nl * hd * hd + hd * od) * 2
                           + n * 4
                           + n * od * 4))
    kernel = functools.partial(conv_relu_mlp_kernel, num_mlp_layers=num_mlp_layers)
    return pl.pallas_call(
        kernel,
        out_shape=jax.ShapeDtypeStruct((n, od), jnp.float32),
        grid_spec=pltpu.PrefetchScalarGridSpec(
            num_scalar_prefetch=0, grid=grid,
            in_specs=[_a_spec(tm, tk, grid[1]),                           # edge counts (int8)
                      pl.BlockSpec((tm, 1), lambda i, k: (i, 0)),         # 1/deg (f32)
                      _src_spec(tk, f, grid[1]),                          # h src block
                      pl.BlockSpec((tm, f), lambda i, k: (i, 0)),         # h row block
                      pl.BlockSpec((f, hd), lambda i, k: (0, 0)),         # W_l
                      pl.BlockSpec((f, hd), lambda i, k: (0, 0)),         # W_r
                      pl.BlockSpec((1, hd), lambda i, k: (0, 0)),         # bias
                      pl.BlockSpec((nl, hd, hd), lambda i, k: (0, 0, 0)), # MLP W
                      pl.BlockSpec((nl, 1, hd), lambda i, k: (0, 0, 0)),  # MLP b
                      pl.BlockSpec((hd, od), lambda i, k: (0, 0)),        # head W
                      pl.BlockSpec((1, od), lambda i, k: (0, 0))],        # head b
            out_specs=pl.BlockSpec((tm, od), lambda i, k: (i, 0)),
            scratch_shapes=[pltpu.VMEM((tm, f), jnp.float32)]),
        compiler_params=pltpu.CompilerParams(
            dimension_semantics=("parallel", "arbitrary"),
            vmem_limit_bytes=_VMEM_LIMIT),
        cost_estimate=cost,
    )(a_cnt, deg_inv, h, h, w_l, w_r, b, mlp_w, mlp_b, out_w, out_b)


# ----------------------------- parameters ----------------------------------

def xavier_uniform(key, fan_in, fan_out):
    bound = (6.0 / (fan_in + fan_out)) ** 0.5
    # stored already transposed: (fan_in, fan_out) so kernels do x @ W
    return jax.random.uniform(key, (fan_in, fan_out), jnp.float32, -bound, bound)


def init_sage_params(key, input_dim, hidden_dim, output_dim, num_mlp_layers,
                     gcn_layers, f_pad, h_pad, o_pad):
    """Xavier-initialized, zero-padded (lane-dense) and bf16-cast parameters."""
    convs = []
    for i in range(gcn_layers):
        in_dim = input_dim if i == 0 else hidden_dim
        in_pad = f_pad if i == 0 else h_pad
        key, k1, k2 = jax.random.split(key, 3)
        w_l = _pad2(xavier_uniform(k1, in_dim, hidden_dim), in_pad, h_pad)
        w_r = _pad2(xavier_uniform(k2, in_dim, hidden_dim), in_pad, h_pad)
        b = jnp.zeros((1, h_pad), jnp.float32)            # lin_l bias (lin_r has none)
        convs.append((w_l.astype(jnp.bfloat16), w_r.astype(jnp.bfloat16), b))

    mlp_w, mlp_b = [], []
    for _ in range(num_mlp_layers):
        key, k1 = jax.random.split(key)
        mlp_w.append(_pad2(xavier_uniform(k1, hidden_dim, hidden_dim), h_pad, h_pad))
        mlp_b.append(jnp.zeros((1, h_pad), jnp.float32))

    key, k1 = jax.random.split(key)
    out_w = _pad2(xavier_uniform(k1, hidden_dim, output_dim), h_pad, o_pad)
    out_b = jnp.zeros((1, o_pad), jnp.float32)

    return {
        "convs": convs,
        "mlp_w": jnp.stack(mlp_w).astype(jnp.bfloat16),
        "mlp_b": jnp.stack(mlp_b),
        "out_w": out_w.astype(jnp.bfloat16),
        "out_b": out_b,
    }


# ----------------------------- forward pass --------------------------------

def edge_counts_and_deg_inv(edge_index, num_nodes):
    """counts[i, j] = #edges j->i (exact small ints); deg_inv[i] = 1/in-degree(i)."""
    src, dst = edge_index[0], edge_index[1]
    counts = jnp.zeros((num_nodes, num_nodes), jnp.float32).at[dst, src].add(1.0)
    deg = counts.sum(axis=1, keepdims=True)
    deg_inv = jnp.where(deg > 0.0, 1.0 / jnp.maximum(deg, 1.0), 0.0)
    return counts, deg_inv


def choose_tiles(n_nodes):
    """Generation-aware-ish tile choice.

    Small graphs: a single full-array block (rounded to 32 for int8 sublane
    packing). At scale: decoupled TM=512 / TK=2048 -> ~1 MiB int8 A tile per
    step (amortizes ~0.35us/step overhead), X/h re-read cut 2x vs TM=256,
    ~a few MiB double/triple-buffered working set that fits v7x's 64 MiB VMEM,
    and N_PAD/TM >= 4 so the 'parallel' row axis splits across both v7x TCs.
    """
    if n_nodes <= 512:
        n_pad = max(_round_up(n_nodes, 32), 32)
        return n_pad, n_pad, n_pad
    tm, tk = 512, 2048
    n_pad = _round_up(n_nodes, tk)        # tk is a multiple of tm -> lcm
    return n_pad, tm, tk


def make_forward(tm, tk, num_mlp_layers):
    @jax.jit
    def forward(x_pad, a_cnt, deg_inv, params):
        h = x_pad
        # dropout(p, training=False) -> identity; bn=False -> no BatchNorm
        for (w_l, w_r, b) in params["convs"][:-1]:
            h = sage_conv_relu(a_cnt, deg_inv, h, w_l, w_r, b, tm=tm, tk=tk)
        w_l, w_r, b = params["convs"][-1]
        return sage_conv_relu_mlp(a_cnt, deg_inv, h, w_l, w_r, b,
                                  params["mlp_w"], params["mlp_b"],
                                  params["out_w"], params["out_b"],
                                  tm=tm, tk=tk, num_mlp_layers=num_mlp_layers)
    return forward


# ----------------------------- main -----------------------------------------

if __name__ == "__main__":
    INPUT_DIM = 8
    HIDDEN_DIM = 32
    OUTPUT_DIM = 1          # binary_classification
    NUM_LAYERS = 2          # MLP hidden layers
    GCN_LAYERS = 2
    N_NODES = 16
    N_EDGES = 40

    F_PAD = _round_up(INPUT_DIM, LANE)
    H_PAD = _round_up(HIDDEN_DIM, LANE)
    O_PAD = _round_up(OUTPUT_DIM, LANE)

    N_PAD, TM, TK = choose_tiles(N_NODES)

    key = jax.random.PRNGKey(0)
    k_x, k_src, k_dst, k_params = jax.random.split(key, 4)

    x = jax.random.normal(k_x, (N_NODES, INPUT_DIM), jnp.float32)
    src = jax.random.randint(k_src, (N_EDGES,), 0, N_NODES)
    dst = jax.random.randint(k_dst, (N_EDGES,), 0, N_NODES)
    edge_index = jnp.stack([src, dst], axis=0)              # (2, E)

    counts, deg_inv = edge_counts_and_deg_inv(edge_index, N_NODES)
    # A stored in HBM as exact int8 edge counts (half the bytes of bf16 A_norm,
    # no 1/deg quantization); 1/deg stays f32 and is applied in the finalize.
    a_cnt = _pad2(counts, N_PAD, N_PAD).astype(jnp.int8)
    dinv_pad = _pad2(deg_inv, N_PAD, 1).astype(jnp.float32)
    x_pad = _pad2(x, N_PAD, F_PAD).astype(jnp.bfloat16)

    params = init_sage_params(k_params, INPUT_DIM, HIDDEN_DIM, OUTPUT_DIM,
                              NUM_LAYERS, GCN_LAYERS, F_PAD, H_PAD, O_PAD)

    forward = make_forward(TM, TK, NUM_LAYERS)
    out_pad = forward(x_pad, a_cnt, dinv_pad, params)
    jax.block_until_ready(out_pad)

    out = out_pad[:N_NODES, :OUTPUT_DIM]                    # drop lane padding

    assert out.shape == (N_NODES, OUTPUT_DIM)
    assert bool(jnp.all(jnp.isfinite(out)))
    assert bool(jnp.all((out >= 0.0) & (out <= 1.0)))       # sigmoid output range
    print("KERNEL_OK")
</pallas_src>

<mosaic_0001>
module attributes {stable_mosaic.version = 11 : i64} {
  func.func @conv_relu_mlp_kernel(%arg0: i32, %arg1: i32, %arg2: memref<32x32xi8, #tpu.memory_space<vmem>>, %arg3: memref<32x1xf32, #tpu.memory_space<vmem>>, %arg4: memref<32x128xbf16, #tpu.memory_space<vmem>>, %arg5: memref<32x128xbf16, #tpu.memory_space<vmem>>, %arg6: memref<128x128xbf16, #tpu.memory_space<vmem>>, %arg7: memref<128x128xbf16, #tpu.memory_space<vmem>>, %arg8: memref<1x128xf32, #tpu.memory_space<vmem>>, %arg9: memref<2x128x128xbf16, #tpu.memory_space<vmem>>, %arg10: memref<2x1x128xf32, #tpu.memory_space<vmem>>, %arg11: memref<128x128xbf16, #tpu.memory_space<vmem>>, %arg12: memref<1x128xf32, #tpu.memory_space<vmem>>, %arg13: memref<32x128xf32, #tpu.memory_space<vmem>>, %arg14: memref<32x128xf32, #tpu.memory_space<vmem>>) attributes {dimension_semantics = [#tpu.dimension_semantics<parallel>, #tpu.dimension_semantics<arbitrary>], iteration_bounds = array<i64: 1, 1>, scalar_prefetch = 0 : i64, scratch_operands = 1 : i64, tpu.core_type = #tpu.core_type<tc>, window_params = [{transform_indices = @transform_0, window_bounds = array<i64: 32, 32>}, {transform_indices = @transform_1, window_bounds = array<i64: 32, 1>}, {transform_indices = @transform_2, window_bounds = array<i64: 32, 128>}, {transform_indices = @transform_3, window_bounds = array<i64: 32, 128>}, {pipeline_mode = #tpu.pipeline_mode<synchronous>, transform_indices = @transform_4, window_bounds = array<i64: 128, 128>}, {pipeline_mode = #tpu.pipeline_mode<synchronous>, transform_indices = @transform_5, window_bounds = array<i64: 128, 128>}, {pipeline_mode = #tpu.pipeline_mode<synchronous>, transform_indices = @transform_6, window_bounds = array<i64: 1, 128>}, {pipeline_mode = #tpu.pipeline_mode<synchronous>, transform_indices = @transform_7, window_bounds = array<i64: 2, 128, 128>}, {pipeline_mode = #tpu.pipeline_mode<synchronous>, transform_indices = @transform_8, window_bounds = array<i64: 2, 1, 128>}, {pipeline_mode = #tpu.pipeline_mode<synchronous>, transform_indices = @transform_9, window_bounds = array<i64: 128, 128>}, {pipeline_mode = #tpu.pipeline_mode<synchronous>, transform_indices = @transform_10, window_bounds = array<i64: 1, 128>}, {transform_indices = @transform_11, window_bounds = array<i64: 32, 128>}]} {
    %c0_i32 = arith.constant 0 : i32
    %0 = arith.cmpi eq, %arg1, %c0_i32 : i32
    %1 = arith.extui %0 : i1 to i32
    %c0_i32_0 = arith.constant 0 : i32
    %2 = arith.cmpi ne, %1, %c0_i32_0 : i32
    scf.if %2 {
      %cst_10 = arith.constant 0.000000e+00 : f32
      %14 = vector.broadcast %cst_10 : f32 to vector<32x128xf32>
      %c0_11 = arith.constant 0 : index
      %c0_12 = arith.constant 0 : index
      %15 = vector.load %arg14[%c0_11, %c0_12] : memref<32x128xf32, #tpu.memory_space<vmem>>, vector<32x128xf32>
      tpu.vector_store %arg14[%c0_11, %c0_12], %14 {strides = array<i32>} : memref<32x128xf32, #tpu.memory_space<vmem>>, vector<32x128xf32>,
    } else {
    }
    %c0 = arith.constant 0 : index
    %c0_1 = arith.constant 0 : index
    %3 = vector.load %arg2[%c0, %c0_1] : memref<32x32xi8, #tpu.memory_space<vmem>>, vector<32x32xi8>
    %4 = arith.sitofp %3 : vector<32x32xi8> to vector<32x32xf32>
    %5 = arith.truncf %4 : vector<32x32xf32> to vector<32x32xbf16>
    %c0_2 = arith.constant 0 : index
    %c0_3 = arith.constant 0 : index
    %6 = vector.load %arg14[%c0_2, %c0_3] : memref<32x128xf32, #tpu.memory_space<vmem>>, vector<32x128xf32>
    %c0_4 = arith.constant 0 : index
    %c0_5 = arith.constant 0 : index
    %7 = vector.load %arg4[%c0_4, %c0_5] : memref<32x128xbf16, #tpu.memory_space<vmem>>, vector<32x128xbf16>
    %cst = arith.constant dense<0.000000e+00> : vector<32x128xf32>
    %8 = tpu.matmul %5, %7, %cst {dimension_numbers = #tpu.dot_dimension_numbers<[1], [0], [0], [1], [0, 0, 1, 1], [], []>} : vector<32x32xbf16>, vector<32x128xbf16>, vector<32x128xf32> -> vector<32x128xf32>
    %9 = arith.addf %6, %8 : vector<32x128xf32>
    %c0_6 = arith.constant 0 : index
    %c0_7 = arith.constant 0 : index
    %10 = vector.load %arg14[%c0_6, %c0_7] : memref<32x128xf32, #tpu.memory_space<vmem>>, vector<32x128xf32>
    tpu.vector_store %arg14[%c0_6, %c0_7], %9 {strides = array<i32>} : memref<32x128xf32, #tpu.memory_space<vmem>>, vector<32x128xf32>,
    %c0_i32_8 = arith.constant 0 : i32
    %11 = arith.cmpi eq, %arg1, %c0_i32_8 : i32
    %12 = arith.extui %11 : i1 to i32
    %c0_i32_9 = arith.constant 0 : i32
    %13 = arith.cmpi ne, %12, %c0_i32_9 : i32
    scf.if %13 {
      %c0_10 = arith.constant 0 : index
      %c0_11 = arith.constant 0 : index
      %14 = vector.load %arg14[%c0_10, %c0_11] : memref<32x128xf32, #tpu.memory_space<vmem>>, vector<32x128xf32>
      %c0_12 = arith.constant 0 : index
      %c0_13 = arith.constant 0 : index
      %15 = vector.load %arg3[%c0_12, %c0_13] : memref<32x1xf32, #tpu.memory_space<vmem>>, vector<32x1xf32>
      %16 = vector.broadcast %15 : vector<32x1xf32> to vector<32x128xf32>
      %17 = arith.mulf %14, %16 : vector<32x128xf32>
      %18 = arith.truncf %17 : vector<32x128xf32> to vector<32x128xbf16>
      %c0_14 = arith.constant 0 : index
      %c0_15 = arith.constant 0 : index
      %19 = vector.load %arg6[%c0_14, %c0_15] : memref<128x128xbf16, #tpu.memory_space<vmem>>, vector<128x128xbf16>
      %cst_16 = arith.constant dense<0.000000e+00> : vector<32x128xf32>
      %20 = tpu.matmul %18, %19, %cst_16 {dimension_numbers = #tpu.dot_dimension_numbers<[1], [0], [0], [1], [0, 0, 1, 1], [], []>} : vector<32x128xbf16>, vector<128x128xbf16>, vector<32x128xf32> -> vector<32x128xf32>
      %c0_17 = arith.constant 0 : index
      %c0_18 = arith.constant 0 : index
      %21 = vector.load %arg5[%c0_17, %c0_18] : memref<32x128xbf16, #tpu.memory_space<vmem>>, vector<32x128xbf16>
      %c0_19 = arith.constant 0 : index
      %c0_20 = arith.constant 0 : index
      %22 = vector.load %arg7[%c0_19, %c0_20] : memref<128x128xbf16, #tpu.memory_space<vmem>>, vector<128x128xbf16>
      %cst_21 = arith.constant dense<0.000000e+00> : vector<32x128xf32>
      %23 = tpu.matmul %21, %22, %cst_21 {dimension_numbers = #tpu.dot_dimension_numbers<[1], [0], [0], [1], [0, 0, 1, 1], [], []>} : vector<32x128xbf16>, vector<128x128xbf16>, vector<32x128xf32> -> vector<32x128xf32>
      %24 = arith.addf %20, %23 : vector<32x128xf32>
      %c0_22 = arith.constant 0 : index
      %c0_23 = arith.constant 0 : index
      %25 = vector.load %arg8[%c0_22, %c0_23] : memref<1x128xf32, #tpu.memory_space<vmem>>, vector<1x128xf32>
      %26 = vector.broadcast %25 : vector<1x128xf32> to vector<32x128xf32>
      %27 = arith.addf %24, %26 : vector<32x128xf32>
      %cst_24 = arith.constant 0.000000e+00 : f32
      %28 = vector.broadcast %cst_24 : f32 to vector<32x128xf32>
      %29 = arith.maximumf %27, %28 : vector<32x128xf32>
      %30 = arith.truncf %29 : vector<32x128xf32> to vector<32x128xbf16>
      %c0_25 = arith.constant 0 : index
      %c0_26 = arith.constant 0 : index
      %c0_27 = arith.constant 0 : index
      %31 = vector.load %arg9[%c0_25, %c0_26, %c0_27] : memref<2x128x128xbf16, #tpu.memory_space<vmem>>, vector<1x128x128xbf16>
      %32 = vector.shape_cast %31 : vector<1x128x128xbf16> to vector<128x128xbf16>
      %cst_28 = arith.constant dense<0.000000e+00> : vector<32x128xf32>
      %33 = tpu.matmul %30, %32, %cst_28 {dimension_numbers = #tpu.dot_dimension_numbers<[1], [0], [0], [1], [0, 0, 1, 1], [], []>} : vector<32x128xbf16>, vector<128x128xbf16>, vector<32x128xf32> -> vector<32x128xf32>
      %c0_29 = arith.constant 0 : index
      %c0_30 = arith.constant 0 : index
      %c0_31 = arith.constant 0 : index
      %34 = vector.load %arg10[%c0_29, %c0_30, %c0_31] : memref<2x1x128xf32, #tpu.memory_space<vmem>>, vector<1x1x128xf32>
      %35 = vector.shape_cast %34 : vector<1x1x128xf32> to vector<1x128xf32>
      %36 = vector.broadcast %35 : vector<1x128xf32> to vector<32x128xf32>
      %37 = arith.addf %33, %36 : vector<32x128xf32>
      %cst_32 = arith.constant 0.000000e+00 : f32
      %38 = vector.broadcast %cst_32 : f32 to vector<32x128xf32>
      %39 = arith.maximumf %37, %38 : vector<32x128xf32>
      %40 = arith.truncf %39 : vector<32x128xf32> to vector<32x128xbf16>
      %c1 = arith.constant 1 : index
      %c0_33 = arith.constant 0 : index
      %c0_34 = arith.constant 0 : index
      %41 = vector.load %arg9[%c1, %c0_33, %c0_34] : memref<2x128x128xbf16, #tpu.memory_space<vmem>>, vector<1x128x128xbf16>
      %42 = vector.shape_cast %41 : vector<1x128x128xbf16> to vector<128x128xbf16>
      %cst_35 = arith.constant dense<0.000000e+00> : vector<32x128xf32>
      %43 = tpu.matmul %40, %42, %cst_35 {dimension_numbers = #tpu.dot_dimension_numbers<[1], [0], [0], [1], [0, 0, 1, 1], [], []>} : vector<32x128xbf16>, vector<128x128xbf16>, vector<32x128xf32> -> vector<32x128xf32>
      %c1_36 = arith.constant 1 : index
      %c0_37 = arith.constant 0 : index
      %c0_38 = arith.constant 0 : index
      %44 = vector.load %arg10[%c1_36, %c0_37, %c0_38] : memref<2x1x128xf32, #tpu.memory_space<vmem>>, vector<1x1x128xf32>
      %45 = vector.shape_cast %44 : vector<1x1x128xf32> to vector<1x128xf32>
      %46 = vector.broadcast %45 : vector<1x128xf32> to vector<32x128xf32>
      %47 = arith.addf %43, %46 : vector<32x128xf32>
      %cst_39 = arith.constant 0.000000e+00 : f32
      %48 = vector.broadcast %cst_39 : f32 to vector<32x128xf32>
      %49 = arith.maximumf %47, %48 : vector<32x128xf32>
      %50 = arith.truncf %49 : vector<32x128xf32> to vector<32x128xbf16>
      %c0_40 = arith.constant 0 : index
      %c0_41 = arith.constant 0 : index
      %51 = vector.load %arg11[%c0_40, %c0_41] : memref<128x128xbf16, #tpu.memory_space<vmem>>, vector<128x128xbf16>
      %cst_42 = arith.constant dense<0.000000e+00> : vector<32x128xf32>
      %52 = tpu.matmul %50, %51, %cst_42 {dimension_numbers = #tpu.dot_dimension_numbers<[1], [0], [0], [1], [0, 0, 1, 1], [], []>} : vector<32x128xbf16>, vector<128x128xbf16>, vector<32x128xf32> -> vector<32x128xf32>
      %c0_43 = arith.constant 0 : index
      %c0_44 = arith.constant 0 : index
      %53 = vector.load %arg12[%c0_43, %c0_44] : memref<1x128xf32, #tpu.memory_space<vmem>>, vector<1x128xf32>
      %54 = vector.broadcast %53 : vector<1x128xf32> to vector<32x128xf32>
      %55 = arith.addf %52, %54 : vector<32x128xf32>
      %cst_45 = arith.constant 0.000000e+00 : f32
      %56 = vector.broadcast %cst_45 : f32 to vector<32x128xf32>
      %57 = arith.subf %56, %55 : vector<32x128xf32>
      %58 = math.exp %57 : vector<32x128xf32>
      %cst_46 = arith.constant 1.000000e+00 : f32
      %59 = vector.broadcast %cst_46 : f32 to vector<32x128xf32>
      %60 = arith.addf %59, %58 : vector<32x128xf32>
      %61 = tpu.reciprocal %60 {approx = true} : vector<32x128xf32> -> vector<32x128xf32>
      %cst_47 = arith.constant 0.000000e+00 : f32
      %cst_48 = arith.constant 1.000000e+00 : f32
      %62 = vector.broadcast %cst_47 : f32 to vector<32x128xf32>
      %63 = arith.maximumf %62, %61 : vector<32x128xf32>
      %64 = vector.broadcast %cst_48 : f32 to vector<32x128xf32>
      %65 = arith.minimumf %64, %63 : vector<32x128xf32>
      %c0_49 = arith.constant 0 : index
      %c0_50 = arith.constant 0 : index
      %66 = vector.load %arg13[%c0_49, %c0_50] : memref<32x128xf32, #tpu.memory_space<vmem>>, vector<32x128xf32>
      tpu.vector_store %arg13[%c0_49, %c0_50], %65 {strides = array<i32>} : memref<32x128xf32, #tpu.memory_space<vmem>>, vector<32x128xf32>,
    } else {
    }
    return
  }
  func.func @transform_0(%arg0: i32, %arg1: i32) -> (i32, i32) {
    %c0_i32 = arith.constant 0 : i32
    return %arg0, %arg1 : i32, i32
  }
  func.func @transform_1(%arg0: i32, %arg1: i32) -> (i32, i32) {
    %c0_i32 = arith.constant 0 : i32
    %c0_i32_0 = arith.constant 0 : i32
    return %arg0, %c0_i32 : i32, i32
  }
  func.func @transform_2(%arg0: i32, %arg1: i32) -> (i32, i32) {
    %c0_i32 = arith.constant 0 : i32
    %c0_i32_0 = arith.constant 0 : i32
    return %arg1, %c0_i32 : i32, i32
  }
  func.func @transform_3(%arg0: i32, %arg1: i32) -> (i32, i32) {
    %c0_i32 = arith.constant 0 : i32
    %c0_i32_0 = arith.constant 0 : i32
    return %arg0, %c0_i32 : i32, i32
  }
  func.func @transform_4(%arg0: i32, %arg1: i32) -> (i32, i32) {
    %c0_i32 = arith.constant 0 : i32
    %c0_i32_0 = arith.constant 0 : i32
    %c0_i32_1 = arith.constant 0 : i32
    return %c0_i32, %c0_i32_0 : i32, i32
  }
  func.func @transform_5(%arg0: i32, %arg1: i32) -> (i32, i32) {
    %c0_i32 = arith.constant 0 : i32
    %c0_i32_0 = arith.constant 0 : i32
    %c0_i32_1 = arith.constant 0 : i32
    return %c0_i32, %c0_i32_0 : i32, i32
  }
  func.func @transform_6(%arg0: i32, %arg1: i32) -> (i32, i32) {
    %c0_i32 = arith.constant 0 : i32
    %c0_i32_0 = arith.constant 0 : i32
    %c0_i32_1 = arith.constant 0 : i32
    return %c0_i32, %c0_i32_0 : i32, i32
  }
  func.func @transform_7(%arg0: i32, %arg1: i32) -> (i32, i32, i32) {
    %c0_i32 = arith.constant 0 : i32
    %c0_i32_0 = arith.constant 0 : i32
    %c0_i32_1 = arith.constant 0 : i32
    %c0_i32_2 = arith.constant 0 : i32
    return %c0_i32, %c0_i32_0, %c0_i32_1 : i32, i32, i32
  }
  func.func @transform_8(%arg0: i32, %arg1: i32) -> (i32, i32, i32) {
    %c0_i32 = arith.constant 0 : i32
    %c0_i32_0 = arith.constant 0 : i32
    %c0_i32_1 = arith.constant 0 : i32
    %c0_i32_2 = arith.constant 0 : i32
    return %c0_i32, %c0_i32_0, %c0_i32_1 : i32, i32, i32
  }
  func.func @transform_9(%arg0: i32, %arg1: i32) -> (i32, i32) {
    %c0_i32 = arith.constant 0 : i32
    %c0_i32_0 = arith.constant 0 : i32
    %c0_i32_1 = arith.constant 0 : i32
    return %c0_i32, %c0_i32_0 : i32, i32
  }
  func.func @transform_10(%arg0: i32, %arg1: i32) -> (i32, i32) {
    %c0_i32 = arith.constant 0 : i32
    %c0_i32_0 = arith.constant 0 : i32
    %c0_i32_1 = arith.constant 0 : i32
    return %c0_i32, %c0_i32_0 : i32, i32
  }
  func.func @transform_11(%arg0: i32, %arg1: i32) -> (i32, i32) {
    %c0_i32 = arith.constant 0 : i32
    %c0_i32_0 = arith.constant 0 : i32
    return %arg0, %c0_i32 : i32, i32
  }
}

module attributes {stable_mosaic.version = 11 : i64} {
  func.func @conv_relu_kernel(%arg0: i32, %arg1: i32, %arg2: memref<32x32xi8, #tpu.memory_space<vmem>>, %arg3: memref<32x1xf32, #tpu.memory_space<vmem>>, %arg4: memref<32x128xbf16, #tpu.memory_space<vmem>>, %arg5: memref<32x128xbf16, #tpu.memory_space<vmem>>, %arg6: memref<128x128xbf16, #tpu.memory_space<vmem>>, %arg7: memref<128x128xbf16, #tpu.memory_space<vmem>>, %arg8: memref<1x128xf32, #tpu.memory_space<vmem>>, %arg9: memref<32x128xbf16, #tpu.memory_space<vmem>>, %arg10: memref<32x128xf32, #tpu.memory_space<vmem>>) attributes {dimension_semantics = [#tpu.dimension_semantics<parallel>, #tpu.dimension_semantics<arbitrary>], iteration_bounds = array<i64: 1, 1>, scalar_prefetch = 0 : i64, scratch_operands = 1 : i64, tpu.core_type = #tpu.core_type<tc>, window_params = [{transform_indices = @transform_0, window_bounds = array<i64: 32, 32>}, {transform_indices = @transform_1, window_bounds = array<i64: 32, 1>}, {transform_indices = @transform_2, window_bounds = array<i64: 32, 128>}, {transform_indices = @transform_3, window_bounds = array<i64: 32, 128>}, {pipeline_mode = #tpu.pipeline_mode<synchronous>, transform_indices = @transform_4, window_bounds = array<i64: 128, 128>}, {pipeline_mode = #tpu.pipeline_mode<synchronous>, transform_indices = @transform_5, window_bounds = array<i64: 128, 128>}, {pipeline_mode = #tpu.pipeline_mode<synchronous>, transform_indices = @transform_6, window_bounds = array<i64: 1, 128>}, {transform_indices = @transform_7, window_bounds = array<i64: 32, 128>}]} {
    %c0_i32 = arith.constant 0 : i32
    %0 = arith.cmpi eq, %arg1, %c0_i32 : i32
    %1 = arith.extui %0 : i1 to i32
    %c0_i32_0 = arith.constant 0 : i32
    %2 = arith.cmpi ne, %1, %c0_i32_0 : i32
    scf.if %2 {
      %cst_10 = arith.constant 0.000000e+00 : f32
      %14 = vector.broadcast %cst_10 : f32 to vector<32x128xf32>
      %c0_11 = arith.constant 0 : index
      %c0_12 = arith.constant 0 : index
      %15 = vector.load %arg10[%c0_11, %c0_12] : memref<32x128xf32, #tpu.memory_space<vmem>>, vector<32x128xf32>
      tpu.vector_store %arg10[%c0_11, %c0_12], %14 {strides = array<i32>} : memref<32x128xf32, #tpu.memory_space<vmem>>, vector<32x128xf32>,
    } else {
    }
    %c0 = arith.constant 0 : index
    %c0_1 = arith.constant 0 : index
    %3 = vector.load %arg2[%c0, %c0_1] : memref<32x32xi8, #tpu.memory_space<vmem>>, vector<32x32xi8>
    %4 = arith.sitofp %3 : vector<32x32xi8> to vector<32x32xf32>
    %5 = arith.truncf %4 : vector<32x32xf32> to vector<32x32xbf16>
    %c0_2 = arith.constant 0 : index
    %c0_3 = arith.constant 0 : index
    %6 = vector.load %arg10[%c0_2, %c0_3] : memref<32x128xf32, #tpu.memory_space<vmem>>, vector<32x128xf32>
    %c0_4 = arith.constant 0 : index
    %c0_5 = arith.constant 0 : index
    %7 = vector.load %arg4[%c0_4, %c0_5] : memref<32x128xbf16, #tpu.memory_space<vmem>>, vector<32x128xbf16>
    %cst = arith.constant dense<0.000000e+00> : vector<32x128xf32>
    %8 = tpu.matmul %5, %7, %cst {dimension_numbers = #tpu.dot_dimension_numbers<[1], [0], [0], [1], [0, 0, 1, 1], [], []>} : vector<32x32xbf16>, vector<32x128xbf16>, vector<32x128xf32> -> vector<32x128xf32>
    %9 = arith.addf %6, %8 : vector<32x128xf32>
    %c0_6 = arith.constant 0 : index
    %c0_7 = arith.constant 0 : index
    %10 = vector.load %arg10[%c0_6, %c0_7] : memref<32x128xf32, #tpu.memory_space<vmem>>, vector<32x128xf32>
    tpu.vector_store %arg10[%c0_6, %c0_7], %9 {strides = array<i32>} : memref<32x128xf32, #tpu.memory_space<vmem>>, vector<32x128xf32>,
    %c0_i32_8 = arith.constant 0 : i32
    %11 = arith.cmpi eq, %arg1, %c0_i32_8 : i32
    %12 = arith.extui %11 : i1 to i32
    %c0_i32_9 = arith.constant 0 : i32
    %13 = arith.cmpi ne, %12, %c0_i32_9 : i32
    scf.if %13 {
      %c0_10 = arith.constant 0 : index
      %c0_11 = arith.constant 0 : index
      %14 = vector.load %arg10[%c0_10, %c0_11] : memref<32x128xf32, #tpu.memory_space<vmem>>, vector<32x128xf32>
      %c0_12 = arith.constant 0 : index
      %c0_13 = arith.constant 0 : index
      %15 = vector.load %arg3[%c0_12, %c0_13] : memref<32x1xf32, #tpu.memory_space<vmem>>, vector<32x1xf32>
      %16 = vector.broadcast %15 : vector<32x1xf32> to vector<32x128xf32>
      %17 = arith.mulf %14, %16 : vector<32x128xf32>
      %18 = arith.truncf %17 : vector<32x128xf32> to vector<32x128xbf16>
      %c0_14 = arith.constant 0 : index
      %c0_15 = arith.constant 0 : index
      %19 = vector.load %arg6[%c0_14, %c0_15] : memref<128x128xbf16, #tpu.memory_space<vmem>>, vector<128x128xbf16>
      %cst_16 = arith.constant dense<0.000000e+00> : vector<32x128xf32>
      %20 = tpu.matmul %18, %19, %cst_16 {dimension_numbers = #tpu.dot_dimension_numbers<[1], [0], [0], [1], [0, 0, 1, 1], [], []>} : vector<32x128xbf16>, vector<128x128xbf16>, vector<32x128xf32> -> vector<32x128xf32>
      %c0_17 = arith.constant 0 : index
      %c0_18 = arith.constant 0 : index
      %21 = vector.load %arg5[%c0_17, %c0_18] : memref<32x128xbf16, #tpu.memory_space<vmem>>, vector<32x128xbf16>
      %c0_19 = arith.constant 0 : index
      %c0_20 = arith.constant 0 : index
      %22 = vector.load %arg7[%c0_19, %c0_20] : memref<128x128xbf16, #tpu.memory_space<vmem>>, vector<128x128xbf16>
      %cst_21 = arith.constant dense<0.000000e+00> : vector<32x128xf32>
      %23 = tpu.matmul %21, %22, %cst_21 {dimension_numbers = #tpu.dot_dimension_numbers<[1], [0], [0], [1], [0, 0, 1, 1], [], []>} : vector<32x128xbf16>, vector<128x128xbf16>, vector<32x128xf32> -> vector<32x128xf32>
      %24 = arith.addf %20, %23 : vector<32x128xf32>
      %c0_22 = arith.constant 0 : index
      %c0_23 = arith.constant 0 : index
      %25 = vector.load %arg8[%c0_22, %c0_23] : memref<1x128xf32, #tpu.memory_space<vmem>>, vector<1x128xf32>
      %26 = vector.broadcast %25 : vector<1x128xf32> to vector<32x128xf32>
      %27 = arith.addf %24, %26 : vector<32x128xf32>
      %cst_24 = arith.constant 0.000000e+00 : f32
      %28 = vector.broadcast %cst_24 : f32 to vector<32x128xf32>
      %29 = arith.maximumf %27, %28 : vector<32x128xf32>
      %30 = arith.truncf %29 : vector<32x128xf32> to vector<32x128xbf16>
      %c0_25 = arith.constant 0 : index
      %c0_26 = arith.constant 0 : index
      %31 = vector.load %arg9[%c0_25, %c0_26] : memref<32x128xbf16, #tpu.memory_space<vmem>>, vector<32x128xbf16>
      tpu.vector_store %arg9[%c0_25, %c0_26], %30 {strides = array<i32>} : memref<32x128xbf16, #tpu.memory_space<vmem>>, vector<32x128xbf16>,
    } else {
    }
    return
  }
  func.func @transform_0(%arg0: i32, %arg1: i32) -> (i32, i32) {
    %c0_i32 = arith.constant 0 : i32
    return %arg0, %arg1 : i32, i32
  }
  func.func @transform_1(%arg0: i32, %arg1: i32) -> (i32, i32) {
    %c0_i32 = arith.constant 0 : i32
    %c0_i32_0 = arith.constant 0 : i32
    return %arg0, %c0_i32 : i32, i32
  }
  func.func @transform_2(%arg0: i32, %arg1: i32) -> (i32, i32) {
    %c0_i32 = arith.constant 0 : i32
    %c0_i32_0 = arith.constant 0 : i32
    return %arg1, %c0_i32 : i32, i32
  }
  func.func @transform_3(%arg0: i32, %arg1: i32) -> (i32, i32) {
    %c0_i32 = arith.constant 0 : i32
    %c0_i32_0 = arith.constant 0 : i32
    return %arg0, %c0_i32 : i32, i32
  }
  func.func @transform_4(%arg0: i32, %arg1: i32) -> (i32, i32) {
    %c0_i32 = arith.constant 0 : i32
    %c0_i32_0 = arith.constant 0 : i32
    %c0_i32_1 = arith.constant 0 : i32
    return %c0_i32, %c0_i32_0 : i32, i32
  }
  func.func @transform_5(%arg0: i32, %arg1: i32) -> (i32, i32) {
    %c0_i32 = arith.constant 0 : i32
    %c0_i32_0 = arith.constant 0 : i32
    %c0_i32_1 = arith.constant 0 : i32
    return %c0_i32, %c0_i32_0 : i32, i32
  }
  func.func @transform_6(%arg0: i32, %arg1: i32) -> (i32, i32) {
    %c0_i32 = arith.constant 0 : i32
    %c0_i32_0 = arith.constant 0 : i32
    %c0_i32_1 = arith.constant 0 : i32
    return %c0_i32, %c0_i32_0 : i32, i32
  }
  func.func @transform_7(%arg0: i32, %arg1: i32) -> (i32, i32) {
    %c0_i32 = arith.constant 0 : i32
    %c0_i32_0 = arith.constant 0 : i32
    return %arg0, %c0_i32 : i32, i32
  }
}

</mosaic_0001>

<llo_original>
// kernel: forward.2
$region0: #{forward.2}
  #allocation0 [shape = 'u32[]', space=smem, size = 0x4, offset = 0x4, fixed_abs, tag = 'smem constant byte address 0x4 - core index']
  #allocation1 [shape = 'u32[144,128]{1,0:T(1,128)}', space=vmem, size = 0x12000, scoped, tag = 'internal scratch']
  #allocation2 [shape = 'f32[32,128]{1,0:T(8,128)}', space=vmem, size = 0x4000, scoped, tag = 'scratch operand']
  %s0 = inlined_call_operand.vmem [shape: s8[32,32], index: 0, kind: input, shape index: {}]
  %s1 = inlined_call_operand.vmem [shape: f32[32,1], index: 1, kind: input, shape index: {}]
  %s2 = inlined_call_operand.hbm [shape: bf16[32,128], index: 2, kind: input, shape index: {}, may-alias: {2,3}]
  %s3 = inlined_call_operand.hbm [shape: bf16[32,128], index: 3, kind: input, shape index: {}, may-alias: {2,3}]
  %s4 = inlined_call_operand.hbm [shape: bf16[128,128], index: 4, kind: input, shape index: {}]
  %s5 = inlined_call_operand.hbm [shape: bf16[128,128], index: 5, kind: input, shape index: {}]
  %s6 = inlined_call_operand.hbm [shape: f32[1,128], index: 6, kind: input, shape index: {}]
  %s7 = inlined_call_operand.vmem [shape: bf16[32,128], index: 7, kind: output, shape index: {}]
  %s8 = sld [smem:[#allocation0]]
  $region66: #{forward.2} parent=0
    _
  %s10 = ssub.s32 1, %s8
  %s11 = scalar_select 0, %s10, %s8
  $region1: #{forward.2} parent=0
    #allocation3 [shape = 'u8[8192]{0}', space=vmem, size = 0x2000, scoped, tag = 'input window, operand 2, single buffered']
    #allocation4 [shape = 's32[1]{0}', space=sflag, size = 0x4, scoped, tag = 'scoped memory for forward.2']
    #allocation5 [shape = 'u8[8192]{0}', space=vmem, size = 0x2000, scoped, tag = 'input window, operand 3, single buffered']
    #allocation6 [shape = 's32[1]{0}', space=sflag, size = 0x4, scoped, tag = 'scoped memory for forward.2']
    #allocation7 [shape = 'u8[32768]{0}', space=vmem, size = 0x8000, scoped, tag = 'input window, operand 4, single buffered']
    #allocation8 [shape = 'u8[32768]{0}', space=vmem, size = 0x8000, scoped, tag = 'input window, operand 5, single buffered']
    #allocation9 [shape = 's32[1]{0}', space=sflag, size = 0x4, scoped, tag = 'scoped memory for forward.2']
    #allocation10 [shape = 'u8[512]{0}', space=vmem, size = 0x400, scoped, tag = 'input window, operand 6, single buffered']
    %12 = vsyncpa [#allocation4], 0
    %13 = vsyncpa [#allocation6], 0
    %14 = vsyncpa [#allocation9], 0
    // Predicated region
    $region2: #{forward.2} parent=1 // pred_check
      _
    $region3: #{forward.2} parent=1 // pred_check_branch
      %16 = sbr.rel (0) target = $region5
    $region4: #{forward.2} parent=1 // pred_region
      _
    $region5: #{forward.2} parent=1 // pred_fallthru
      _
    // Predicated region
    $region6: #{forward.2} parent=1 // pred_check
      _
    $region7: #{forward.2} parent=1 // pred_check_branch
      %18 = sbr.rel (0) target = $region9
    $region8: #{forward.2} parent=1 // pred_region
      _
    $region9: #{forward.2} parent=1 // pred_fallthru
      _
    // Predicated region
    $region10: #{forward.2} parent=1 // pred_check
      _
    $region11: #{forward.2} parent=1 // pred_check_branch
      %20 = sbr.rel (0) target = $region13
    $region12: #{forward.2} parent=1 // pred_region
      %s22 = ssub.s32 256, 256
      %23 = vsyncadd [#allocation4], %s22
      %s24 = sshll.u32 [#allocation3], 4
      %s25 = int_to_ptr.vmem [resolvable:$true] %s24
      %30 = dma.hbm_to_vmem [thread:$0]  %s2, 256, %s25, [#allocation4], 64, 64, 4
    $region13: #{forward.2} parent=1 // pred_fallthru
      _
    // Predicated region
    $region14: #{forward.2} parent=1 // pred_check
      _
    $region15: #{forward.2} parent=1 // pred_check_branch
      %32 = sbr.rel (0) target = $region17
    $region16: #{forward.2} parent=1 // pred_region
      %s34 = ssub.s32 256, 256
      %35 = vsyncadd [#allocation6], %s34
      %s36 = sshll.u32 [#allocation5], 4
      %s37 = int_to_ptr.vmem [resolvable:$true] %s36
      %42 = dma.hbm_to_vmem [thread:$0]  %s3, 256, %s37, [#allocation6], 64, 64, 4
    $region17: #{forward.2} parent=1 // pred_fallthru
      _
    // Predicated region
    $region18: #{forward.2} parent=1 // pred_check
      _
    $region19: #{forward.2} parent=1 // pred_check_branch
      %44 = sbr.rel (0) target = $region21
    $region20: #{forward.2} parent=1 // pred_region
      %s46 = ssub.s32 1024, 1024
      %47 = vsyncadd [#allocation6], %s46
      %s48 = sshll.u32 [#allocation7], 4
      %s49 = int_to_ptr.vmem [resolvable:$true] %s48
      %54 = dma.hbm_to_vmem [thread:$0]  %s4, 1024, %s49, [#allocation6], 64, 64, 4
    $region21: #{forward.2} parent=1 // pred_fallthru
      _
    // Predicated region
    $region22: #{forward.2} parent=1 // pred_check
      _
    $region23: #{forward.2} parent=1 // pred_check_branch
      %56 = sbr.rel (0) target = $region25
    $region24: #{forward.2} parent=1 // pred_region
      %s58 = ssub.s32 1024, 1024
      %59 = vsyncadd [#allocation9], %s58
      %s60 = sshll.u32 [#allocation8], 4
      %s61 = int_to_ptr.vmem [resolvable:$true] %s60
      %66 = dma.hbm_to_vmem [thread:$0]  %s5, 1024, %s61, [#allocation9], 64, 64, 4
    $region25: #{forward.2} parent=1 // pred_fallthru
      _
    // Predicated region
    $region26: #{forward.2} parent=1 // pred_check
      _
    $region27: #{forward.2} parent=1 // pred_check_branch
      %68 = sbr.rel (0) target = $region29
    $region28: #{forward.2} parent=1 // pred_region
      %s70 = ssub.s32 16, 16
      %71 = vsyncadd [#allocation9], %s70
      %s73 = sshll.u32 [#allocation10], 4
      %s74 = int_to_ptr.vmem [resolvable:$true] %s73
      %76 = dma.hbm_to_vmem [thread:$0]  %s6, 16, %s74, [#allocation9]
    $region29: #{forward.2} parent=1 // pred_fallthru
      _
    // Predicated region
    $region30: #{forward.2} parent=1 // pred_check
      _
    $region31: #{forward.2} parent=1 // pred_check_branch
      %78 = sbr.rel (0) target = $region33
    $region32: #{forward.2} parent=1 // pred_region
      %79 = dma.done [#allocation4], 256
    $region33: #{forward.2} parent=1 // pred_fallthru
      _
    // Predicated region
    $region34: #{forward.2} parent=1 // pred_check
      _
    $region35: #{forward.2} parent=1 // pred_check_branch
      %81 = sbr.rel (0) target = $region37
    $region36: #{forward.2} parent=1 // pred_region
      %82 = dma.done [#allocation6], 256
    $region37: #{forward.2} parent=1 // pred_fallthru
      _
    // Predicated region
    $region38: #{forward.2} parent=1 // pred_check
      _
    $region39: #{forward.2} parent=1 // pred_check_branch
      %84 = sbr.rel (0) target = $region41
    $region40: #{forward.2} parent=1 // pred_region
      %85 = dma.done [#allocation6], 1024
    $region41: #{forward.2} parent=1 // pred_fallthru
      _
    // Predicated region
    $region42: #{forward.2} parent=1 // pred_check
      _
    $region43: #{forward.2} parent=1 // pred_check_branch
      %87 = sbr.rel (0) target = $region45
    $region44: #{forward.2} parent=1 // pred_region
      %88 = dma.done [#allocation9], 1024
    $region45: #{forward.2} parent=1 // pred_fallthru
      _
    // Predicated region
    $region46: #{forward.2} parent=1 // pred_check
      _
    $region47: #{forward.2} parent=1 // pred_check_branch
      %90 = sbr.rel (0) target = $region49
    $region48: #{forward.2} parent=1 // pred_region
      %91 = dma.done [#allocation9], 16
    $region49: #{forward.2} parent=1 // pred_fallthru
      _
    %p93 = scmp.eq.s32.totalorder 0, 0
    // Predicated region
    $region50: #{forward.2} parent=1 // pred_check
      %p94 = pneg %p93
    $region51: #{forward.2} parent=1 // pred_check_branch
      %96 = sbr.rel (%p94) target = $region53
    $region52: #{forward.2} parent=1 // pred_region
      %97 = vst [vmem:[#allocation2] sm:$0xff] 0.0
      %98 = vst [vmem:[#allocation2 + $0x8] sm:$0xff] 0.0
      %99 = vst [vmem:[#allocation2 + $0x10] sm:$0xff] 0.0
      %100 = vst [vmem:[#allocation2 + $0x18] sm:$0xff] 0.0
    $region53: #{forward.2} parent=1 // pred_fallthru
      _
    %v101 = vld [vmem:[%s0] sm:$0xff]
    %v102 = vunpack.c.l.s8.bf16 %v101
    %v103 = vunpack.c.h.s8.bf16 %v101
    %v104 = vld [vmem:[#allocation2] sm:$0xff]
    %v105 = vld [vmem:[#allocation2 + $0x8] sm:$0xff]
    %v106 = vld [vmem:[#allocation2 + $0x10] sm:$0xff]
    %v107 = vld [vmem:[#allocation2 + $0x18] sm:$0xff]
    %v108 = vld [vmem:[#allocation3] sm:$0xf]
    %v109 = vld [vmem:[#allocation3 + $0x4] sm:$0xf]
    %v110 = vld [vmem:[#allocation3 + $0x8] sm:$0xf]
    %v111 = vld [vmem:[#allocation3 + $0xc] sm:$0xf]
    %v116 = vunpack.c.l.b16 %v108
    %v117 = vunpack.c.l.b16 %v109
    %v118 = vunpack.c.l.b16 %v110
    %v119 = vunpack.c.l.b16 %v111
    %v120 = vpack.c.b16 %v117, %v116
    %v121 = vpack.c.b16 %v119, %v118
    %vm124 = vcmask 261120
    %v126 = vsel %vm124, %v102, 0
    %v129 = vsel %vm124, %v103, 0
    %131 = vmatprep.subr.bf16.mxu0 0
    %132 = vmatpush1.bf16.msra.mxu0 0
    %133 = vmatprep.subr.bf16.mxu0 0
    %134 = vmatpush1.bf16.msra.mxu0 0
    %135 = vmatprep.subr.bf16.mxu0 0
    %136 = vmatpush1.bf16.msra.mxu0 0
    %137 = vmatprep.subr.bf16.mxu0 0
    %138 = vmatpush1.bf16.msra.mxu0 0
    %139 = vmatprep.subr.bf16.mxu0 0
    %140 = vmatpush1.bf16.msra.mxu0 0
    %141 = vmatprep.subr.bf16.mxu0 0
    %142 = vmatpush1.bf16.msra.mxu0 0
    %143 = vmatprep.subr.bf16.mxu0 0
    %144 = vmatpush1.bf16.msra.mxu0 %v121
    %145 = vmatprep.subr.bf16.mxu0 0
    %146 = vmatpush1.bf16.msra.mxu0 %v120
    %147 = vmatprep.subr.bf16.mxu0 0
    %148 = vmatpush2.bf16.msra.mxu0 0
    %149 = vmatprep.subr.bf16.mxu0 0
    %150 = vmatpush2.bf16.msra.mxu0 0
    %151 = vmatprep.subr.bf16.mxu0 0
    %152 = vmatpush2.bf16.msra.mxu0 0
    %153 = vmatprep.subr.bf16.mxu0 0
    %154 = vmatpush2.bf16.msra.mxu0 0
    %155 = vmatprep.subr.bf16.mxu0 0
    %156 = vmatpush2.bf16.msra.mxu0 0
    %157 = vmatprep.subr.bf16.mxu0 0
    %158 = vmatpush2.bf16.msra.mxu0 0
    %159 = vmatprep.subr.bf16.mxu0 0
    %160 = vmatpush2.bf16.msra.mxu0 0
    %161 = vmatprep.subr.bf16.mxu0 0
    %162 = vmatpush2.bf16.msra.mxu0 0
    %163 = vmatprep.mubr.bf16.mxu0 0
    %164 = vmatmul.mubr.bf16.gmra.mxu0 %v126
    %v165 = vpop.f32.mrf.mxu0
    %v166 = vadd.f32 0.0, %v165
    %v167 = vpop.f32.mrf.mxu0
    %v168 = vpop.f32.mrf.mxu0
    %v169 = vadd.f32 0.0, %v168
    %v170 = vpop.f32.mrf.mxu0
    %171 = vmatprep.mubr.bf16.mxu0 0
    %172 = vmatmul.mubr.bf16.gmra.mxu0 %v129
    %v173 = vpop.f32.mrf.mxu0
    %v174 = vadd.f32 0.0, %v173
    %v175 = vpop.f32.mrf.mxu0
    %v176 = vpop.f32.mrf.mxu0
    %v177 = vadd.f32 0.0, %v176
    %v178 = vpop.f32.mrf.mxu0
    %179 = vdwg.mxu0
    %v180 = vadd.f32 %v104, %v166
    %v181 = vadd.f32 %v105, %v169
    %v182 = vadd.f32 %v106, %v174
    %v183 = vadd.f32 %v107, %v177
    %184 = vst [vmem:[#allocation2] sm:$0xff] %v180
    %185 = vst [vmem:[#allocation2 + $0x8] sm:$0xff] %v181
    %186 = vst [vmem:[#allocation2 + $0x10] sm:$0xff] %v182
    %187 = vst [vmem:[#allocation2 + $0x18] sm:$0xff] %v183
    // Predicated region
    $region54: #{forward.2} parent=1 // pred_check
      %p188 = pneg %p93
    $region55: #{forward.2} parent=1 // pred_check_branch
      %190 = sbr.rel (%p188) target = $region57
    $region56: #{forward.2} parent=1 // pred_region
      %v191 = vld [vmem:[#allocation2] sm:$0xff]
      %v192 = vld [vmem:[#allocation2 + $0x8] sm:$0xff]
      %v193 = vld [vmem:[#allocation2 + $0x10] sm:$0xff]
      %v194 = vld [vmem:[#allocation2 + $0x18] sm:$0xff]
      %v195 = vld [vmem:[%s1] sm:$0xff]
      %v196 = vld [vmem:[%s1 + $0x8] sm:$0xff]
      %v197 = vld [vmem:[%s1 + $0x10] sm:$0xff]
      %v198 = vld [vmem:[%s1 + $0x18] sm:$0xff]
      %200 = vset.pattern.permute.xlu0 0
      %201 = vperm.xlu0 %200, %v195
      %v202 = vpop.permute.xlu0 %201
      %205 = vset.pattern.permute.xlu0 0
      %206 = vperm.xlu0 %205, %v196
      %v207 = vpop.permute.xlu0 %206
      %210 = vset.pattern.permute.xlu0 0
      %211 = vperm.xlu0 %210, %v197
      %v212 = vpop.permute.xlu0 %211
      %215 = vset.pattern.permute.xlu0 0
      %216 = vperm.xlu0 %215, %v198
      %v217 = vpop.permute.xlu0 %216
      %v219 = vmul.f32 %v191, %v202
      %v220 = vmul.f32 %v192, %v207
      %v221 = vmul.f32 %v193, %v212
      %v222 = vmul.f32 %v194, %v217
      %v223 = vpack.c.bf16 %v220, %v219
      %v224 = vpack.c.bf16 %v222, %v221
      %v225 = vld [vmem:[#allocation7] sm:$0xf]
      %v226 = vld [vmem:[#allocation7 + $0x4] sm:$0xf]
      %v227 = vld [vmem:[#allocation7 + $0x8] sm:$0xf]
      %v228 = vld [vmem:[#allocation7 + $0xc] sm:$0xf]
      %v229 = vld [vmem:[#allocation7 + $0x10] sm:$0xf]
      %v230 = vld [vmem:[#allocation7 + $0x14] sm:$0xf]
      %v231 = vld [vmem:[#allocation7 + $0x18] sm:$0xf]
      %v232 = vld [vmem:[#allocation7 + $0x1c] sm:$0xf]
      %v233 = vld [vmem:[#allocation7 + $0x20] sm:$0xf]
      %v234 = vld [vmem:[#allocation7 + $0x24] sm:$0xf]
      %v235 = vld [vmem:[#allocation7 + $0x28] sm:$0xf]
      %v236 = vld [vmem:[#allocation7 + $0x2c] sm:$0xf]
      %v237 = vld [vmem:[#allocation7 + $0x30] sm:$0xf]
      %v238 = vld [vmem:[#allocation7 + $0x34] sm:$0xf]
      %v239 = vld [vmem:[#allocation7 + $0x38] sm:$0xf]
      %v240 = vld [vmem:[#allocation7 + $0x3c] sm:$0xf]
      %v241 = vld [vmem:[#allocation5] sm:$0xf]
      %v242 = vld [vmem:[#allocation5 + $0x4] sm:$0xf]
      %v243 = vld [vmem:[#allocation5 + $0x8] sm:$0xf]
      %v244 = vld [vmem:[#allocation5 + $0xc] sm:$0xf]
      %v245 = vld [vmem:[#allocation8] sm:$0xf]
      %v246 = vld [vmem:[#allocation8 + $0x4] sm:$0xf]
      %v247 = vld [vmem:[#allocation8 + $0x8] sm:$0xf]
      %v248 = vld [vmem:[#allocation8 + $0xc] sm:$0xf]
      %v249 = vld [vmem:[#allocation8 + $0x10] sm:$0xf]
      %v250 = vld [vmem:[#allocation8 + $0x14] sm:$0xf]
      %v251 = vld [vmem:[#allocation8 + $0x18] sm:$0xf]
      %v252 = vld [vmem:[#allocation8 + $0x1c] sm:$0xf]
      %v253 = vld [vmem:[#allocation8 + $0x20] sm:$0xf]
      %v254 = vld [vmem:[#allocation8 + $0x24] sm:$0xf]
      %v255 = vld [vmem:[#allocation8 + $0x28] sm:$0xf]
      %v256 = vld [vmem:[#allocation8 + $0x2c] sm:$0xf]
      %v257 = vld [vmem:[#allocation8 + $0x30] sm:$0xf]
      %v258 = vld [vmem:[#allocation8 + $0x34] sm:$0xf]
      %v259 = vld [vmem:[#allocation8 + $0x38] sm:$0xf]
      %v260 = vld [vmem:[#allocation8 + $0x3c] sm:$0xf]
      %v265 = vunpack.c.l.b16 %v241
      %v266 = vunpack.c.l.b16 %v242
      %v267 = vunpack.c.l.b16 %v243
      %v268 = vunpack.c.l.b16 %v244
      %v269 = vpack.c.b16 %v266, %v265
      %v270 = vpack.c.b16 %v268, %v267
      %v289 = vunpack.c.l.b16 %v245
      %v290 = vunpack.c.l.b16 %v246
      %v291 = vunpack.c.l.b16 %v247
      %v292 = vunpack.c.l.b16 %v248
      %v293 = vunpack.c.l.b16 %v249
      %v294 = vunpack.c.l.b16 %v250
      %v295 = vunpack.c.l.b16 %v251
      %v296 = vunpack.c.l.b16 %v252
      %v297 = vunpack.c.l.b16 %v253
      %v298 = vunpack.c.l.b16 %v254
      %v299 = vunpack.c.l.b16 %v255
      %v300 = vunpack.c.l.b16 %v256
      %v301 = vunpack.c.l.b16 %v257
      %v302 = vunpack.c.l.b16 %v258
      %v303 = vunpack.c.l.b16 %v259
      %v304 = vunpack.c.l.b16 %v260
      %v305 = vpack.c.b16 %v290, %v289
      %v306 = vpack.c.b16 %v292, %v291
      %v307 = vpack.c.b16 %v294, %v293
      %v308 = vpack.c.b16 %v296, %v295
      %v309 = vpack.c.b16 %v298, %v297
      %v310 = vpack.c.b16 %v300, %v299
      %v311 = vpack.c.b16 %v302, %v301
      %v312 = vpack.c.b16 %v304, %v303
      %321 = vmatprep.subr.bf16.mxu0 0
      %322 = vmatpush1.bf16.msra.mxu0 %v312
      %323 = vmatprep.subr.bf16.mxu0 0
      %324 = vmatpush1.bf16.msra.mxu0 %v311
      %325 = vmatprep.subr.bf16.mxu0 0
      %326 = vmatpush1.bf16.msra.mxu0 %v310
      %327 = vmatprep.subr.bf16.mxu0 0
      %328 = vmatpush1.bf16.msra.mxu0 %v309
      %329 = vmatprep.subr.bf16.mxu0 0
      %330 = vmatpush1.bf16.msra.mxu0 %v308
      %331 = vmatprep.subr.bf16.mxu0 0
      %332 = vmatpush1.bf16.msra.mxu0 %v307
      %333 = vmatprep.subr.bf16.mxu0 0
      %334 = vmatpush1.bf16.msra.mxu0 %v306
      %335 = vmatprep.subr.bf16.mxu0 0
      %336 = vmatpush1.bf16.msra.mxu0 %v305
      %337 = vmatprep.subr.bf16.mxu0 0
      %338 = vmatpush2.bf16.msra.mxu0 0
      %339 = vmatprep.subr.bf16.mxu0 0
      %340 = vmatpush2.bf16.msra.mxu0 0
      %341 = vmatprep.subr.bf16.mxu0 0
      %342 = vmatpush2.bf16.msra.mxu0 0
      %343 = vmatprep.subr.bf16.mxu0 0
      %344 = vmatpush2.bf16.msra.mxu0 0
      %345 = vmatprep.subr.bf16.mxu0 0
      %346 = vmatpush2.bf16.msra.mxu0 0
      %347 = vmatprep.subr.bf16.mxu0 0
      %348 = vmatpush2.bf16.msra.mxu0 0
      %349 = vmatprep.subr.bf16.mxu0 0
      %350 = vmatpush2.bf16.msra.mxu0 0
      %351 = vmatprep.subr.bf16.mxu0 0
      %352 = vmatpush2.bf16.msra.mxu0 0
      %353 = vmatprep.mubr.bf16.mxu0 0
      %354 = vmatmul.mubr.bf16.gmra.mxu0 %v269
      %v355 = vpop.f32.mrf.mxu0
      %v356 = vadd.f32 0.0, %v355
      %v357 = vpop.f32.mrf.mxu0
      %v358 = vpop.f32.mrf.mxu0
      %v359 = vadd.f32 0.0, %v358
      %v360 = vpop.f32.mrf.mxu0
      %361 = vmatprep.mubr.bf16.mxu0 0
      %362 = vmatmul.mubr.bf16.gmra.mxu0 %v270
      %v363 = vpop.f32.mrf.mxu0
      %v364 = vadd.f32 0.0, %v363
      %v365 = vpop.f32.mrf.mxu0
      %v366 = vpop.f32.mrf.mxu0
      %v367 = vadd.f32 0.0, %v366
      %v368 = vpop.f32.mrf.mxu0
      %369 = vdwg.mxu0
      %v386 = vunpack.c.l.b16 %v225
      %v387 = vunpack.c.l.b16 %v226
      %v388 = vunpack.c.l.b16 %v227
      %v389 = vunpack.c.l.b16 %v228
      %v390 = vunpack.c.l.b16 %v229
      %v391 = vunpack.c.l.b16 %v230
      %v392 = vunpack.c.l.b16 %v231
      %v393 = vunpack.c.l.b16 %v232
      %v394 = vunpack.c.l.b16 %v233
      %v395 = vunpack.c.l.b16 %v234
      %v396 = vunpack.c.l.b16 %v235
      %v397 = vunpack.c.l.b16 %v236
      %v398 = vunpack.c.l.b16 %v237
      %v399 = vunpack.c.l.b16 %v238
      %v400 = vunpack.c.l.b16 %v239
      %v401 = vunpack.c.l.b16 %v240
      %v402 = vpack.c.b16 %v387, %v386
      %v403 = vpack.c.b16 %v389, %v388
      %v404 = vpack.c.b16 %v391, %v390
      %v405 = vpack.c.b16 %v393, %v392
      %v406 = vpack.c.b16 %v395, %v394
      %v407 = vpack.c.b16 %v397, %v396
      %v408 = vpack.c.b16 %v399, %v398
      %v409 = vpack.c.b16 %v401, %v400
      %418 = vmatprep.subr.bf16.mxu0 0
      %419 = vmatpush1.bf16.msra.mxu0 %v409
      %420 = vmatprep.subr.bf16.mxu0 0
      %421 = vmatpush1.bf16.msra.mxu0 %v408
      %422 = vmatprep.subr.bf16.mxu0 0
      %423 = vmatpush1.bf16.msra.mxu0 %v407
      %424 = vmatprep.subr.bf16.mxu0 0
      %425 = vmatpush1.bf16.msra.mxu0 %v406
      %426 = vmatprep.subr.bf16.mxu0 0
      %427 = vmatpush1.bf16.msra.mxu0 %v405
      %428 = vmatprep.subr.bf16.mxu0 0
      %429 = vmatpush1.bf16.msra.mxu0 %v404
      %430 = vmatprep.subr.bf16.mxu0 0
      %431 = vmatpush1.bf16.msra.mxu0 %v403
      %432 = vmatprep.subr.bf16.mxu0 0
      %433 = vmatpush1.bf16.msra.mxu0 %v402
      %434 = vmatprep.subr.bf16.mxu0 0
      %435 = vmatpush2.bf16.msra.mxu0 0
      %436 = vmatprep.subr.bf16.mxu0 0
      %437 = vmatpush2.bf16.msra.mxu0 0
      %438 = vmatprep.subr.bf16.mxu0 0
      %439 = vmatpush2.bf16.msra.mxu0 0
      %440 = vmatprep.subr.bf16.mxu0 0
      %441 = vmatpush2.bf16.msra.mxu0 0
      %442 = vmatprep.subr.bf16.mxu0 0
      %443 = vmatpush2.bf16.msra.mxu0 0
      %444 = vmatprep.subr.bf16.mxu0 0
      %445 = vmatpush2.bf16.msra.mxu0 0
      %446 = vmatprep.subr.bf16.mxu0 0
      %447 = vmatpush2.bf16.msra.mxu0 0
      %448 = vmatprep.subr.bf16.mxu0 0
      %449 = vmatpush2.bf16.msra.mxu0 0
      %450 = vmatprep.mubr.bf16.mxu0 0
      %451 = vmatmul.mubr.bf16.gmra.mxu0 %v223
      %v452 = vpop.f32.mrf.mxu0
      %v453 = vadd.f32 %v356, %v452
      %v454 = vpop.f32.mrf.mxu0
      %v455 = vpop.f32.mrf.mxu0
      %v456 = vadd.f32 %v359, %v455
      %v457 = vpop.f32.mrf.mxu0
      %458 = vmatprep.mubr.bf16.mxu0 0
      %459 = vmatmul.mubr.bf16.gmra.mxu0 %v224
      %v460 = vpop.f32.mrf.mxu0
      %v461 = vadd.f32 %v364, %v460
      %v462 = vpop.f32.mrf.mxu0
      %v463 = vpop.f32.mrf.mxu0
      %v464 = vadd.f32 %v367, %v463
      %v465 = vpop.f32.mrf.mxu0
      %466 = vdwg.mxu0
      %v467 = vld [vmem:[#allocation10] sm:$0x1]
      %v469 = vlaneseq
      %v470 = vshrl.u32 %v469, 7
      %v471 = vsub.s32 0, %v470
      %v472 = vrot.slane %v467, %v471
      %v474 = vadd.f32 %v453, %v472
      %v475 = vadd.f32 %v456, %v472
      %v476 = vadd.f32 %v461, %v472
      %v477 = vadd.f32 %v464, %v472
      %v478 = vmax.f32 %v474, 0.0
      %v479 = vmax.f32 %v475, 0.0
      %v480 = vmax.f32 %v476, 0.0
      %v481 = vmax.f32 %v477, 0.0
      %v482 = vpack.c.bf16 %v479, %v478
      %v483 = vpack.c.bf16 %v481, %v480
      %v486 = vunpack.c.l.b16 %v482
      %v487 = vunpack.c.h.b16 %v482
      %v488 = vunpack.c.l.b16 %v483
      %v489 = vunpack.c.h.b16 %v483
      %v490 = vpack.c.b16 %v486, %v486
      %v491 = vpack.c.b16 %v487, %v487
      %v492 = vpack.c.b16 %v488, %v488
      %v493 = vpack.c.b16 %v489, %v489
      %498 = vst [vmem:[%s7] sm:$0xf] %v490
      %499 = vst [vmem:[%s7 + $0x4] sm:$0xf] %v491
      %500 = vst [vmem:[%s7 + $0x8] sm:$0xf] %v492
      %501 = vst [vmem:[%s7 + $0xc] sm:$0xf] %v493
    $region57: #{forward.2} parent=1 // pred_fallthru
      _
    // Predicated region
    $region58: #{forward.2} parent=1 // pred_check
      _
    $region59: #{forward.2} parent=1 // pred_check_branch
      %503 = sbr.rel (0) target = $region61
    $region60: #{forward.2} parent=1 // pred_region
      _
    $region61: #{forward.2} parent=1 // pred_fallthru
      _
    // Predicated region
    $region62: #{forward.2} parent=1 // pred_check
      _
    $region63: #{forward.2} parent=1 // pred_check_branch
      %505 = sbr.rel (0) target = $region65
    $region64: #{forward.2} parent=1 // pred_region
      _
    $region65: #{forward.2} parent=1 // pred_fallthru
      _
    %506 = vsyncpa [#allocation4], 1
    %507 = vsyncpa [#allocation6], 1
    %508 = vsyncpa [#allocation9], 1

// kernel: forward.3
$region0: #{forward.3}
  #allocation0 [shape = 'u32[]', space=smem, size = 0x4, offset = 0x4, fixed_abs, tag = 'smem constant byte address 0x4 - core index']
  #allocation1 [shape = 'u32[144,128]{1,0:T(1,128)}', space=vmem, size = 0x12000, scoped, tag = 'internal scratch']
  #allocation2 [shape = 'f32[32,128]{1,0:T(8,128)}', space=vmem, size = 0x4000, scoped, tag = 'scratch operand']
  %s0 = inlined_call_operand.vmem [shape: s8[32,32], index: 0, kind: input, shape index: {}]
  %s1 = inlined_call_operand.vmem [shape: f32[32,1], index: 1, kind: input, shape index: {}]
  %s2 = inlined_call_operand.vmem [shape: bf16[32,128], index: 2, kind: input, shape index: {}, may-alias: {2,3}]
  %s3 = inlined_call_operand.vmem [shape: bf16[32,128], index: 3, kind: input, shape index: {}, may-alias: {2,3}]
  %s4 = inlined_call_operand.vmem [shape: bf16[128,128], index: 4, kind: input, shape index: {}]
  %s5 = inlined_call_operand.vmem [shape: bf16[128,128], index: 5, kind: input, shape index: {}]
  %s6 = inlined_call_operand.hbm [shape: f32[1,128], index: 6, kind: input, shape index: {}]
  %s7 = inlined_call_operand.vmem [shape: bf16[2,128,128], index: 7, kind: input, shape index: {}]
  %s8 = inlined_call_operand.hbm [shape: f32[2,1,128], index: 8, kind: input, shape index: {}]
  %s9 = inlined_call_operand.hbm [shape: bf16[128,128], index: 9, kind: input, shape index: {}]
  %s10 = inlined_call_operand.vmem [shape: f32[1,128], index: 10, kind: input, shape index: {}]
  %s11 = inlined_call_operand.hbm [shape: f32[32,128], index: 11, kind: output, shape index: {}]
  %s12 = sld [smem:[#allocation0]]
  $region74: #{forward.3} parent=0
    _
  %s14 = ssub.s32 1, %s12
  %s15 = scalar_select 0, %s14, %s12
  $region1: #{forward.3} parent=0
    #allocation3 [shape = 'u8[512]{0}', space=vmem, size = 0x400, scoped, tag = 'input window, operand 6, single buffered']
    #allocation4 [shape = 's32[1]{0}', space=sflag, size = 0x4, scoped, tag = 'scoped memory for forward.3']
    #allocation5 [shape = 's32[1]{0}', space=sflag, size = 0x4, scoped, tag = 'scoped memory for forward.3']
    #allocation6 [shape = 'u8[1024]{0}', space=vmem, size = 0x400, scoped, tag = 'input window, operand 8, single buffered']
    #allocation7 [shape = 's32[1]{0}', space=sflag, size = 0x4, scoped, tag = 'scoped memory for forward.3']
    #allocation8 [shape = 'u8[32768]{0}', space=vmem, size = 0x8000, scoped, tag = 'input window, operand 9, single buffered']
    #allocation9 [shape = 'u8[16384]{0}', space=vmem, size = 0x4000, scoped, tag = 'output window, operand 0, single buffered']
    %16 = vsyncpa [#allocation4], 0
    %17 = vsyncpa [#allocation7], 0
    %18 = vsyncpa [#allocation5], 0
    // Predicated region
    $region2: #{forward.3} parent=1 // pred_check
      _
    $region3: #{forward.3} parent=1 // pred_check_branch
      %20 = sbr.rel (0) target = $region5
    $region4: #{forward.3} parent=1 // pred_region
      _
    $region5: #{forward.3} parent=1 // pred_fallthru
      _
    // Predicated region
    $region6: #{forward.3} parent=1 // pred_check
      _
    $region7: #{forward.3} parent=1 // pred_check_branch
      %22 = sbr.rel (0) target = $region9
    $region8: #{forward.3} parent=1 // pred_region
      _
    $region9: #{forward.3} parent=1 // pred_fallthru
      _
    // Predicated region
    $region10: #{forward.3} parent=1 // pred_check
      _
    $region11: #{forward.3} parent=1 // pred_check_branch
      %24 = sbr.rel (0) target = $region13
    $region12: #{forward.3} parent=1 // pred_region
      _
    $region13: #{forward.3} parent=1 // pred_fallthru
      _
    // Predicated region
    $region14: #{forward.3} parent=1 // pred_check
      _
    $region15: #{forward.3} parent=1 // pred_check_branch
      %26 = sbr.rel (0) target = $region17
    $region16: #{forward.3} parent=1 // pred_region
      _
    $region17: #{forward.3} parent=1 // pred_fallthru
      _
    // Predicated region
    $region18: #{forward.3} parent=1 // pred_check
      _
    $region19: #{forward.3} parent=1 // pred_check_branch
      %28 = sbr.rel (0) target = $region21
    $region20: #{forward.3} parent=1 // pred_region
      _
    $region21: #{forward.3} parent=1 // pred_fallthru
      _
    // Predicated region
    $region22: #{forward.3} parent=1 // pred_check
      _
    $region23: #{forward.3} parent=1 // pred_check_branch
      %30 = sbr.rel (0) target = $region25
    $region24: #{forward.3} parent=1 // pred_region
      _
    $region25: #{forward.3} parent=1 // pred_fallthru
      _
    // Predicated region
    $region26: #{forward.3} parent=1 // pred_check
      _
    $region27: #{forward.3} parent=1 // pred_check_branch
      %32 = sbr.rel (0) target = $region29
    $region28: #{forward.3} parent=1 // pred_region
      %s34 = ssub.s32 16, 16
      %35 = vsyncadd [#allocation4], %s34
      %s37 = sshll.u32 [#allocation3], 4
      %s38 = int_to_ptr.vmem [resolvable:$true] %s37
      %40 = dma.hbm_to_vmem [thread:$0]  %s6, 16, %s38, [#allocation4]
    $region29: #{forward.3} parent=1 // pred_fallthru
      _
    // Predicated region
    $region30: #{forward.3} parent=1 // pred_check
      _
    $region31: #{forward.3} parent=1 // pred_check_branch
      %42 = sbr.rel (0) target = $region33
    $region32: #{forward.3} parent=1 // pred_region
      _
    $region33: #{forward.3} parent=1 // pred_fallthru
      _
    // Predicated region
    $region34: #{forward.3} parent=1 // pred_check
      _
    $region35: #{forward.3} parent=1 // pred_check_branch
      %44 = sbr.rel (0) target = $region37
    $region36: #{forward.3} parent=1 // pred_region
      %s46 = ssub.s32 32, 32
      %47 = vsyncadd [#allocation7], %s46
      %s48 = sshll.u32 [#allocation6], 4
      %s49 = int_to_ptr.vmem [resolvable:$true] %s48
      %54 = dma.hbm_to_vmem [thread:$0]  %s8, 32, %s49, [#allocation7], 16, 16, 1
    $region37: #{forward.3} parent=1 // pred_fallthru
      _
    // Predicated region
    $region38: #{forward.3} parent=1 // pred_check
      _
    $region39: #{forward.3} parent=1 // pred_check_branch
      %56 = sbr.rel (0) target = $region41
    $region40: #{forward.3} parent=1 // pred_region
      %s58 = ssub.s32 1024, 1024
      %59 = vsyncadd [#allocation7], %s58
      %s60 = sshll.u32 [#allocation8], 4
      %s61 = int_to_ptr.vmem [resolvable:$true] %s60
      %66 = dma.hbm_to_vmem [thread:$0]  %s9, 1024, %s61, [#allocation7], 64, 64, 4
    $region41: #{forward.3} parent=1 // pred_fallthru
      _
    // Predicated region
    $region42: #{forward.3} parent=1 // pred_check
      _
    $region43: #{forward.3} parent=1 // pred_check_branch
      %68 = sbr.rel (0) target = $region45
    $region44: #{forward.3} parent=1 // pred_region
      _
    $region45: #{forward.3} parent=1 // pred_fallthru
      _
    // Predicated region
    $region46: #{forward.3} parent=1 // pred_check
      _
    $region47: #{forward.3} parent=1 // pred_check_branch
      %70 = sbr.rel (0) target = $region49
    $region48: #{forward.3} parent=1 // pred_region
      %71 = dma.done [#allocation4], 16
    $region49: #{forward.3} parent=1 // pred_fallthru
      _
    // Predicated region
    $region50: #{forward.3} parent=1 // pred_check
      _
    $region51: #{forward.3} parent=1 // pred_check_branch
      %73 = sbr.rel (0) target = $region53
    $region52: #{forward.3} parent=1 // pred_region
      %74 = dma.done [#allocation7], 32
    $region53: #{forward.3} parent=1 // pred_fallthru
      _
    // Predicated region
    $region54: #{forward.3} parent=1 // pred_check
      _
    $region55: #{forward.3} parent=1 // pred_check_branch
      %76 = sbr.rel (0) target = $region57
    $region56: #{forward.3} parent=1 // pred_region
      %77 = dma.done [#allocation7], 1024
    $region57: #{forward.3} parent=1 // pred_fallthru
      _
    %p79 = scmp.eq.s32.totalorder 0, 0
    // Predicated region
    $region58: #{forward.3} parent=1 // pred_check
      %p80 = pneg %p79
    $region59: #{forward.3} parent=1 // pred_check_branch
      %82 = sbr.rel (%p80) target = $region61
    $region60: #{forward.3} parent=1 // pred_region
      %83 = vst [vmem:[#allocation2] sm:$0xff] 0.0
      %84 = vst [vmem:[#allocation2 + $0x8] sm:$0xff] 0.0
      %85 = vst [vmem:[#allocation2 + $0x10] sm:$0xff] 0.0
      %86 = vst [vmem:[#allocation2 + $0x18] sm:$0xff] 0.0
    $region61: #{forward.3} parent=1 // pred_fallthru
      _
    %v87 = vld [vmem:[%s0] sm:$0xff]
    %v88 = vunpack.c.l.s8.bf16 %v87
    %v89 = vunpack.c.h.s8.bf16 %v87
    %v90 = vld [vmem:[#allocation2] sm:$0xff]
    %v91 = vld [vmem:[#allocation2 + $0x8] sm:$0xff]
    %v92 = vld [vmem:[#allocation2 + $0x10] sm:$0xff]
    %v93 = vld [vmem:[#allocation2 + $0x18] sm:$0xff]
    %v94 = vld [vmem:[%s2] sm:$0xf]
    %v95 = vld [vmem:[%s2 + $0x4] sm:$0xf]
    %v96 = vld [vmem:[%s2 + $0x8] sm:$0xf]
    %v97 = vld [vmem:[%s2 + $0xc] sm:$0xf]
    %v102 = vunpack.c.l.b16 %v94
    %v103 = vunpack.c.l.b16 %v95
    %v104 = vunpack.c.l.b16 %v96
    %v105 = vunpack.c.l.b16 %v97
    %v106 = vpack.c.b16 %v103, %v102
    %v107 = vpack.c.b16 %v105, %v104
    %vm110 = vcmask 261120
    %v112 = vsel %vm110, %v88, 0
    %v115 = vsel %vm110, %v89, 0
    %117 = vmatprep.subr.bf16.mxu0 0
    %118 = vmatpush1.bf16.msra.mxu0 0
    %119 = vmatprep.subr.bf16.mxu0 0
    %120 = vmatpush1.bf16.msra.mxu0 0
    %121 = vmatprep.subr.bf16.mxu0 0
    %122 = vmatpush1.bf16.msra.mxu0 0
    %123 = vmatprep.subr.bf16.mxu0 0
    %124 = vmatpush1.bf16.msra.mxu0 0
    %125 = vmatprep.subr.bf16.mxu0 0
    %126 = vmatpush1.bf16.msra.mxu0 0
    %127 = vmatprep.subr.bf16.mxu0 0
    %128 = vmatpush1.bf16.msra.mxu0 0
    %129 = vmatprep.subr.bf16.mxu0 0
    %130 = vmatpush1.bf16.msra.mxu0 %v107
    %131 = vmatprep.subr.bf16.mxu0 0
    %132 = vmatpush1.bf16.msra.mxu0 %v106
    %133 = vmatprep.subr.bf16.mxu0 0
    %134 = vmatpush2.bf16.msra.mxu0 0
    %135 = vmatprep.subr.bf16.mxu0 0
    %136 = vmatpush2.bf16.msra.mxu0 0
    %137 = vmatprep.subr.bf16.mxu0 0
    %138 = vmatpush2.bf16.msra.mxu0 0
    %139 = vmatprep.subr.bf16.mxu0 0
    %140 = vmatpush2.bf16.msra.mxu0 0
    %141 = vmatprep.subr.bf16.mxu0 0
    %142 = vmatpush2.bf16.msra.mxu0 0
    %143 = vmatprep.subr.bf16.mxu0 0
    %144 = vmatpush2.bf16.msra.mxu0 0
    %145 = vmatprep.subr.bf16.mxu0 0
    %146 = vmatpush2.bf16.msra.mxu0 0
    %147 = vmatprep.subr.bf16.mxu0 0
    %148 = vmatpush2.bf16.msra.mxu0 0
    %149 = vmatprep.mubr.bf16.mxu0 0
    %150 = vmatmul.mubr.bf16.gmra.mxu0 %v112
    %v151 = vpop.f32.mrf.mxu0
    %v152 = vadd.f32 0.0, %v151
    %v153 = vpop.f32.mrf.mxu0
    %v154 = vpop.f32.mrf.mxu0
    %v155 = vadd.f32 0.0, %v154
    %v156 = vpop.f32.mrf.mxu0
    %157 = vmatprep.mubr.bf16.mxu0 0
    %158 = vmatmul.mubr.bf16.gmra.mxu0 %v115
    %v159 = vpop.f32.mrf.mxu0
    %v160 = vadd.f32 0.0, %v159
    %v161 = vpop.f32.mrf.mxu0
    %v162 = vpop.f32.mrf.mxu0
    %v163 = vadd.f32 0.0, %v162
    %v164 = vpop.f32.mrf.mxu0
    %165 = vdwg.mxu0
    %v166 = vadd.f32 %v90, %v152
    %v167 = vadd.f32 %v91, %v155
    %v168 = vadd.f32 %v92, %v160
    %v169 = vadd.f32 %v93, %v163
    %170 = vst [vmem:[#allocation2] sm:$0xff] %v166
    %171 = vst [vmem:[#allocation2 + $0x8] sm:$0xff] %v167
    %172 = vst [vmem:[#allocation2 + $0x10] sm:$0xff] %v168
    %173 = vst [vmem:[#allocation2 + $0x18] sm:$0xff] %v169
    // Predicated region
    $region62: #{forward.3} parent=1 // pred_check
      %p174 = pneg %p79
    $region63: #{forward.3} parent=1 // pred_check_branch
      %176 = sbr.rel (%p174) target = $region65
    $region64: #{forward.3} parent=1 // pred_region
      %v177 = vld [vmem:[#allocation2] sm:$0xff]
      %v178 = vld [vmem:[#allocation2 + $0x8] sm:$0xff]
      %v179 = vld [vmem:[#allocation2 + $0x10] sm:$0xff]
      %v180 = vld [vmem:[#allocation2 + $0x18] sm:$0xff]
      %v181 = vld [vmem:[%s1] sm:$0xff]
      %v182 = vld [vmem:[%s1 + $0x8] sm:$0xff]
      %v183 = vld [vmem:[%s1 + $0x10] sm:$0xff]
      %v184 = vld [vmem:[%s1 + $0x18] sm:$0xff]
      %186 = vset.pattern.permute.xlu0 0
      %187 = vperm.xlu0 %186, %v181
      %v188 = vpop.permute.xlu0 %187
      %191 = vset.pattern.permute.xlu0 0
      %192 = vperm.xlu0 %191, %v182
      %v193 = vpop.permute.xlu0 %192
      %196 = vset.pattern.permute.xlu0 0
      %197 = vperm.xlu0 %196, %v183
      %v198 = vpop.permute.xlu0 %197
      %201 = vset.pattern.permute.xlu0 0
      %202 = vperm.xlu0 %201, %v184
      %v203 = vpop.permute.xlu0 %202
      %v205 = vmul.f32 %v177, %v188
      %v206 = vmul.f32 %v178, %v193
      %v207 = vmul.f32 %v179, %v198
      %v208 = vmul.f32 %v180, %v203
      %v209 = vpack.c.bf16 %v206, %v205
      %v210 = vpack.c.bf16 %v208, %v207
      %v211 = vld [vmem:[%s4] sm:$0xf]
      %v212 = vld [vmem:[%s4 + $0x4] sm:$0xf]
      %v213 = vld [vmem:[%s4 + $0x8] sm:$0xf]
      %v214 = vld [vmem:[%s4 + $0xc] sm:$0xf]
      %v215 = vld [vmem:[%s4 + $0x10] sm:$0xf]
      %v216 = vld [vmem:[%s4 + $0x14] sm:$0xf]
      %v217 = vld [vmem:[%s4 + $0x18] sm:$0xf]
      %v218 = vld [vmem:[%s4 + $0x1c] sm:$0xf]
      %v219 = vld [vmem:[%s4 + $0x20] sm:$0xf]
      %v220 = vld [vmem:[%s4 + $0x24] sm:$0xf]
      %v221 = vld [vmem:[%s4 + $0x28] sm:$0xf]
      %v222 = vld [vmem:[%s4 + $0x2c] sm:$0xf]
      %v223 = vld [vmem:[%s4 + $0x30] sm:$0xf]
      %v224 = vld [vmem:[%s4 + $0x34] sm:$0xf]
      %v225 = vld [vmem:[%s4 + $0x38] sm:$0xf]
      %v226 = vld [vmem:[%s4 + $0x3c] sm:$0xf]
      %v227 = vld [vmem:[%s3] sm:$0xf]
      %v228 = vld [vmem:[%s3 + $0x4] sm:$0xf]
      %v229 = vld [vmem:[%s3 + $0x8] sm:$0xf]
      %v230 = vld [vmem:[%s3 + $0xc] sm:$0xf]
      %v231 = vld [vmem:[%s5] sm:$0xf]
      %v232 = vld [vmem:[%s5 + $0x4] sm:$0xf]
      %v233 = vld [vmem:[%s5 + $0x8] sm:$0xf]
      %v234 = vld [vmem:[%s5 + $0xc] sm:$0xf]
      %v235 = vld [vmem:[%s5 + $0x10] sm:$0xf]
      %v236 = vld [vmem:[%s5 + $0x14] sm:$0xf]
      %v237 = vld [vmem:[%s5 + $0x18] sm:$0xf]
      %v238 = vld [vmem:[%s5 + $0x1c] sm:$0xf]
      %v239 = vld [vmem:[%s5 + $0x20] sm:$0xf]
      %v240 = vld [vmem:[%s5 + $0x24] sm:$0xf]
      %v241 = vld [vmem:[%s5 + $0x28] sm:$0xf]
      %v242 = vld [vmem:[%s5 + $0x2c] sm:$0xf]
      %v243 = vld [vmem:[%s5 + $0x30] sm:$0xf]
      %v244 = vld [vmem:[%s5 + $0x34] sm:$0xf]
      %v245 = vld [vmem:[%s5 + $0x38] sm:$0xf]
      %v246 = vld [vmem:[%s5 + $0x3c] sm:$0xf]
      %v251 = vunpack.c.l.b16 %v227
      %v252 = vunpack.c.l.b16 %v228
      %v253 = vunpack.c.l.b16 %v229
      %v254 = vunpack.c.l.b16 %v230
      %v255 = vpack.c.b16 %v252, %v251
      %v256 = vpack.c.b16 %v254, %v253
      %v275 = vunpack.c.l.b16 %v231
      %v276 = vunpack.c.l.b16 %v232
      %v277 = vunpack.c.l.b16 %v233
      %v278 = vunpack.c.l.b16 %v234
      %v279 = vunpack.c.l.b16 %v235
      %v280 = vunpack.c.l.b16 %v236
      %v281 = vunpack.c.l.b16 %v237
      %v282 = vunpack.c.l.b16 %v238
      %v283 = vunpack.c.l.b16 %v239
      %v284 = vunpack.c.l.b16 %v240
      %v285 = vunpack.c.l.b16 %v241
      %v286 = vunpack.c.l.b16 %v242
      %v287 = vunpack.c.l.b16 %v243
      %v288 = vunpack.c.l.b16 %v244
      %v289 = vunpack.c.l.b16 %v245
      %v290 = vunpack.c.l.b16 %v246
      %v291 = vpack.c.b16 %v276, %v275
      %v292 = vpack.c.b16 %v278, %v277
      %v293 = vpack.c.b16 %v280, %v279
      %v294 = vpack.c.b16 %v282, %v281
      %v295 = vpack.c.b16 %v284, %v283
      %v296 = vpack.c.b16 %v286, %v285
      %v297 = vpack.c.b16 %v288, %v287
      %v298 = vpack.c.b16 %v290, %v289
      %307 = vmatprep.subr.bf16.mxu0 0
      %308 = vmatpush1.bf16.msra.mxu0 %v298
      %309 = vmatprep.subr.bf16.mxu0 0
      %310 = vmatpush1.bf16.msra.mxu0 %v297
      %311 = vmatprep.subr.bf16.mxu0 0
      %312 = vmatpush1.bf16.msra.mxu0 %v296
      %313 = vmatprep.subr.bf16.mxu0 0
      %314 = vmatpush1.bf16.msra.mxu0 %v295
      %315 = vmatprep.subr.bf16.mxu0 0
      %316 = vmatpush1.bf16.msra.mxu0 %v294
      %317 = vmatprep.subr.bf16.mxu0 0
      %318 = vmatpush1.bf16.msra.mxu0 %v293
      %319 = vmatprep.subr.bf16.mxu0 0
      %320 = vmatpush1.bf16.msra.mxu0 %v292
      %321 = vmatprep.subr.bf16.mxu0 0
      %322 = vmatpush1.bf16.msra.mxu0 %v291
      %323 = vmatprep.subr.bf16.mxu0 0
      %324 = vmatpush2.bf16.msra.mxu0 0
      %325 = vmatprep.subr.bf16.mxu0 0
      %326 = vmatpush2.bf16.msra.mxu0 0
      %327 = vmatprep.subr.bf16.mxu0 0
      %328 = vmatpush2.bf16.msra.mxu0 0
      %329 = vmatprep.subr.bf16.mxu0 0
      %330 = vmatpush2.bf16.msra.mxu0 0
      %331 = vmatprep.subr.bf16.mxu0 0
      %332 = vmatpush2.bf16.msra.mxu0 0
      %333 = vmatprep.subr.bf16.mxu0 0
      %334 = vmatpush2.bf16.msra.mxu0 0
      %335 = vmatprep.subr.bf16.mxu0 0
      %336 = vmatpush2.bf16.msra.mxu0 0
      %337 = vmatprep.subr.bf16.mxu0 0
      %338 = vmatpush2.bf16.msra.mxu0 0
      %339 = vmatprep.mubr.bf16.mxu0 0
      %340 = vmatmul.mubr.bf16.gmra.mxu0 %v255
      %v341 = vpop.f32.mrf.mxu0
      %v342 = vadd.f32 0.0, %v341
      %v343 = vpop.f32.mrf.mxu0
      %v344 = vpop.f32.mrf.mxu0
      %v345 = vadd.f32 0.0, %v344
      %v346 = vpop.f32.mrf.mxu0
      %347 = vmatprep.mubr.bf16.mxu0 0
      %348 = vmatmul.mubr.bf16.gmra.mxu0 %v256
      %v349 = vpop.f32.mrf.mxu0
      %v350 = vadd.f32 0.0, %v349
      %v351 = vpop.f32.mrf.mxu0
      %v352 = vpop.f32.mrf.mxu0
      %v353 = vadd.f32 0.0, %v352
      %v354 = vpop.f32.mrf.mxu0
      %355 = vdwg.mxu0
      %v372 = vunpack.c.l.b16 %v211
      %v373 = vunpack.c.l.b16 %v212
      %v374 = vunpack.c.l.b16 %v213
      %v375 = vunpack.c.l.b16 %v214
      %v376 = vunpack.c.l.b16 %v215
      %v377 = vunpack.c.l.b16 %v216
      %v378 = vunpack.c.l.b16 %v217
      %v379 = vunpack.c.l.b16 %v218
      %v380 = vunpack.c.l.b16 %v219
      %v381 = vunpack.c.l.b16 %v220
      %v382 = vunpack.c.l.b16 %v221
      %v383 = vunpack.c.l.b16 %v222
      %v384 = vunpack.c.l.b16 %v223
      %v385 = vunpack.c.l.b16 %v224
      %v386 = vunpack.c.l.b16 %v225
      %v387 = vunpack.c.l.b16 %v226
      %v388 = vpack.c.b16 %v373, %v372
      %v389 = vpack.c.b16 %v375, %v374
      %v390 = vpack.c.b16 %v377, %v376
      %v391 = vpack.c.b16 %v379, %v378
      %v392 = vpack.c.b16 %v381, %v380
      %v393 = vpack.c.b16 %v383, %v382
      %v394 = vpack.c.b16 %v385, %v384
      %v395 = vpack.c.b16 %v387, %v386
      %404 = vmatprep.subr.bf16.mxu0 0
      %405 = vmatpush1.bf16.msra.mxu0 %v395
      %406 = vmatprep.subr.bf16.mxu0 0
      %407 = vmatpush1.bf16.msra.mxu0 %v394
      %408 = vmatprep.subr.bf16.mxu0 0
      %409 = vmatpush1.bf16.msra.mxu0 %v393
      %410 = vmatprep.subr.bf16.mxu0 0
      %411 = vmatpush1.bf16.msra.mxu0 %v392
      %412 = vmatprep.subr.bf16.mxu0 0
      %413 = vmatpush1.bf16.msra.mxu0 %v391
      %414 = vmatprep.subr.bf16.mxu0 0
      %415 = vmatpush1.bf16.msra.mxu0 %v390
      %416 = vmatprep.subr.bf16.mxu0 0
      %417 = vmatpush1.bf16.msra.mxu0 %v389
      %418 = vmatprep.subr.bf16.mxu0 0
      %419 = vmatpush1.bf16.msra.mxu0 %v388
      %420 = vmatprep.subr.bf16.mxu0 0
      %421 = vmatpush2.bf16.msra.mxu0 0
      %422 = vmatprep.subr.bf16.mxu0 0
      %423 = vmatpush2.bf16.msra.mxu0 0
      %424 = vmatprep.subr.bf16.mxu0 0
      %425 = vmatpush2.bf16.msra.mxu0 0
      %426 = vmatprep.subr.bf16.mxu0 0
      %427 = vmatpush2.bf16.msra.mxu0 0
      %428 = vmatprep.subr.bf16.mxu0 0
      %429 = vmatpush2.bf16.msra.mxu0 0
      %430 = vmatprep.subr.bf16.mxu0 0
      %431 = vmatpush2.bf16.msra.mxu0 0
      %432 = vmatprep.subr.bf16.mxu0 0
      %433 = vmatpush2.bf16.msra.mxu0 0
      %434 = vmatprep.subr.bf16.mxu0 0
      %435 = vmatpush2.bf16.msra.mxu0 0
      %436 = vmatprep.mubr.bf16.mxu0 0
      %437 = vmatmul.mubr.bf16.gmra.mxu0 %v209
      %v438 = vpop.f32.mrf.mxu0
      %v439 = vadd.f32 %v342, %v438
      %v440 = vpop.f32.mrf.mxu0
      %v441 = vpop.f32.mrf.mxu0
      %v442 = vadd.f32 %v345, %v441
      %v443 = vpop.f32.mrf.mxu0
      %444 = vmatprep.mubr.bf16.mxu0 0
      %445 = vmatmul.mubr.bf16.gmra.mxu0 %v210
      %v446 = vpop.f32.mrf.mxu0
      %v447 = vadd.f32 %v350, %v446
      %v448 = vpop.f32.mrf.mxu0
      %v449 = vpop.f32.mrf.mxu0
      %v450 = vadd.f32 %v353, %v449
      %v451 = vpop.f32.mrf.mxu0
      %452 = vdwg.mxu0
      %v453 = vld [vmem:[#allocation3] sm:$0x1]
      %v455 = vlaneseq
      %v456 = vshrl.u32 %v455, 7
      %v457 = vsub.s32 0, %v456
      %v458 = vrot.slane %v453, %v457
      %v460 = vadd.f32 %v439, %v458
      %v461 = vadd.f32 %v442, %v458
      %v462 = vadd.f32 %v447, %v458
      %v463 = vadd.f32 %v450, %v458
      %v464 = vmax.f32 %v460, 0.0
      %v465 = vmax.f32 %v461, 0.0
      %v466 = vmax.f32 %v462, 0.0
      %v467 = vmax.f32 %v463, 0.0
      %v468 = vpack.c.bf16 %v465, %v464
      %v469 = vpack.c.bf16 %v467, %v466
      %v470 = vld [vmem:[%s7] sm:$0xf]
      %v471 = vld [vmem:[%s7 + $0x4] sm:$0xf]
      %v472 = vld [vmem:[%s7 + $0x8] sm:$0xf]
      %v473 = vld [vmem:[%s7 + $0xc] sm:$0xf]
      %v474 = vld [vmem:[%s7 + $0x10] sm:$0xf]
      %v475 = vld [vmem:[%s7 + $0x14] sm:$0xf]
      %v476 = vld [vmem:[%s7 + $0x18] sm:$0xf]
      %v477 = vld [vmem:[%s7 + $0x1c] sm:$0xf]
      %v478 = vld [vmem:[%s7 + $0x20] sm:$0xf]
      %v479 = vld [vmem:[%s7 + $0x24] sm:$0xf]
      %v480 = vld [vmem:[%s7 + $0x28] sm:$0xf]
      %v481 = vld [vmem:[%s7 + $0x2c] sm:$0xf]
      %v482 = vld [vmem:[%s7 + $0x30] sm:$0xf]
      %v483 = vld [vmem:[%s7 + $0x34] sm:$0xf]
      %v484 = vld [vmem:[%s7 + $0x38] sm:$0xf]
      %v485 = vld [vmem:[%s7 + $0x3c] sm:$0xf]
      %v486 = vld [vmem:[#allocation6] sm:$0x1]
      %v488 = vlaneseq
      %v489 = vshrl.u32 %v488, 7
      %v490 = vsub.s32 0, %v489
      %v491 = vrot.slane %v486, %v490
      %v509 = vunpack.c.l.b16 %v470
      %v510 = vunpack.c.l.b16 %v471
      %v511 = vunpack.c.l.b16 %v472
      %v512 = vunpack.c.l.b16 %v473
      %v513 = vunpack.c.l.b16 %v474
      %v514 = vunpack.c.l.b16 %v475
      %v515 = vunpack.c.l.b16 %v476
      %v516 = vunpack.c.l.b16 %v477
      %v517 = vunpack.c.l.b16 %v478
      %v518 = vunpack.c.l.b16 %v479
      %v519 = vunpack.c.l.b16 %v480
      %v520 = vunpack.c.l.b16 %v481
      %v521 = vunpack.c.l.b16 %v482
      %v522 = vunpack.c.l.b16 %v483
      %v523 = vunpack.c.l.b16 %v484
      %v524 = vunpack.c.l.b16 %v485
      %v525 = vpack.c.b16 %v510, %v509
      %v526 = vpack.c.b16 %v512, %v511
      %v527 = vpack.c.b16 %v514, %v513
      %v528 = vpack.c.b16 %v516, %v515
      %v529 = vpack.c.b16 %v518, %v517
      %v530 = vpack.c.b16 %v520, %v519
      %v531 = vpack.c.b16 %v522, %v521
      %v532 = vpack.c.b16 %v524, %v523
      %541 = vmatprep.subr.bf16.mxu0 0
      %542 = vmatpush1.bf16.msra.mxu0 %v532
      %543 = vmatprep.subr.bf16.mxu0 0
      %544 = vmatpush1.bf16.msra.mxu0 %v531
      %545 = vmatprep.subr.bf16.mxu0 0
      %546 = vmatpush1.bf16.msra.mxu0 %v530
      %547 = vmatprep.subr.bf16.mxu0 0
      %548 = vmatpush1.bf16.msra.mxu0 %v529
      %549 = vmatprep.subr.bf16.mxu0 0
      %550 = vmatpush1.bf16.msra.mxu0 %v528
      %551 = vmatprep.subr.bf16.mxu0 0
      %552 = vmatpush1.bf16.msra.mxu0 %v527
      %553 = vmatprep.subr.bf16.mxu0 0
      %554 = vmatpush1.bf16.msra.mxu0 %v526
      %555 = vmatprep.subr.bf16.mxu0 0
      %556 = vmatpush1.bf16.msra.mxu0 %v525
      %557 = vmatprep.subr.bf16.mxu0 0
      %558 = vmatpush2.bf16.msra.mxu0 0
      %559 = vmatprep.subr.bf16.mxu0 0
      %560 = vmatpush2.bf16.msra.mxu0 0
      %561 = vmatprep.subr.bf16.mxu0 0
      %562 = vmatpush2.bf16.msra.mxu0 0
      %563 = vmatprep.subr.bf16.mxu0 0
      %564 = vmatpush2.bf16.msra.mxu0 0
      %565 = vmatprep.subr.bf16.mxu0 0
      %566 = vmatpush2.bf16.msra.mxu0 0
      %567 = vmatprep.subr.bf16.mxu0 0
      %568 = vmatpush2.bf16.msra.mxu0 0
      %569 = vmatprep.subr.bf16.mxu0 0
      %570 = vmatpush2.bf16.msra.mxu0 0
      %571 = vmatprep.subr.bf16.mxu0 0
      %572 = vmatpush2.bf16.msra.mxu0 0
      %573 = vmatprep.mubr.bf16.mxu0 0
      %574 = vmatmul.mubr.bf16.gmra.mxu0 %v468
      %v575 = vpop.f32.mrf.mxu0
      %v576 = vadd.f32 %v491, %v575
      %v577 = vpop.f32.mrf.mxu0
      %v578 = vpop.f32.mrf.mxu0
      %v579 = vadd.f32 %v491, %v578
      %v580 = vpop.f32.mrf.mxu0
      %581 = vmatprep.mubr.bf16.mxu0 0
      %582 = vmatmul.mubr.bf16.gmra.mxu0 %v469
      %v583 = vpop.f32.mrf.mxu0
      %v584 = vadd.f32 %v491, %v583
      %v585 = vpop.f32.mrf.mxu0
      %v586 = vpop.f32.mrf.mxu0
      %v587 = vadd.f32 %v491, %v586
      %v588 = vpop.f32.mrf.mxu0
      %589 = vdwg.mxu0
      %v590 = vmax.f32 %v576, 0.0
      %v591 = vmax.f32 %v579, 0.0
      %v592 = vmax.f32 %v584, 0.0
      %v593 = vmax.f32 %v587, 0.0
      %v594 = vpack.c.bf16 %v591, %v590
      %v595 = vpack.c.bf16 %v593, %v592
      %s596 = scalar_lea.vmem %s7, 64
      %v597 = vld [vmem:[%s596] sm:$0xf]
      %v598 = vld [vmem:[%s596 + $0x4] sm:$0xf]
      %v599 = vld [vmem:[%s596 + $0x8] sm:$0xf]
      %v600 = vld [vmem:[%s596 + $0xc] sm:$0xf]
      %v601 = vld [vmem:[%s596 + $0x10] sm:$0xf]
      %v602 = vld [vmem:[%s596 + $0x14] sm:$0xf]
      %v603 = vld [vmem:[%s596 + $0x18] sm:$0xf]
      %v604 = vld [vmem:[%s596 + $0x1c] sm:$0xf]
      %v605 = vld [vmem:[%s596 + $0x20] sm:$0xf]
      %v606 = vld [vmem:[%s596 + $0x24] sm:$0xf]
      %v607 = vld [vmem:[%s596 + $0x28] sm:$0xf]
      %v608 = vld [vmem:[%s596 + $0x2c] sm:$0xf]
      %v609 = vld [vmem:[%s596 + $0x30] sm:$0xf]
      %v610 = vld [vmem:[%s596 + $0x34] sm:$0xf]
      %v611 = vld [vmem:[%s596 + $0x38] sm:$0xf]
      %v612 = vld [vmem:[%s596 + $0x3c] sm:$0xf]
      %s613 = scalar_lea.vmem [#allocation6], 1
      %v614 = vld [vmem:[%s613] sm:$0x1]
      %v616 = vlaneseq
      %v617 = vshrl.u32 %v616, 7
      %v618 = vsub.s32 0, %v617
      %v619 = vrot.slane %v614, %v618
      %v637 = vunpack.c.l.b16 %v597
      %v638 = vunpack.c.l.b16 %v598
      %v639 = vunpack.c.l.b16 %v599
      %v640 = vunpack.c.l.b16 %v600
      %v641 = vunpack.c.l.b16 %v601
      %v642 = vunpack.c.l.b16 %v602
      %v643 = vunpack.c.l.b16 %v603
      %v644 = vunpack.c.l.b16 %v604
      %v645 = vunpack.c.l.b16 %v605
      %v646 = vunpack.c.l.b16 %v606
      %v647 = vunpack.c.l.b16 %v607
      %v648 = vunpack.c.l.b16 %v608
      %v649 = vunpack.c.l.b16 %v609
      %v650 = vunpack.c.l.b16 %v610
      %v651 = vunpack.c.l.b16 %v611
      %v652 = vunpack.c.l.b16 %v612
      %v653 = vpack.c.b16 %v638, %v637
      %v654 = vpack.c.b16 %v640, %v639
      %v655 = vpack.c.b16 %v642, %v641
      %v656 = vpack.c.b16 %v644, %v643
      %v657 = vpack.c.b16 %v646, %v645
      %v658 = vpack.c.b16 %v648, %v647
      %v659 = vpack.c.b16 %v650, %v649
      %v660 = vpack.c.b16 %v652, %v651
      %669 = vmatprep.subr.bf16.mxu0 0
      %670 = vmatpush1.bf16.msra.mxu0 %v660
      %671 = vmatprep.subr.bf16.mxu0 0
      %672 = vmatpush1.bf16.msra.mxu0 %v659
      %673 = vmatprep.subr.bf16.mxu0 0
      %674 = vmatpush1.bf16.msra.mxu0 %v658
      %675 = vmatprep.subr.bf16.mxu0 0
      %676 = vmatpush1.bf16.msra.mxu0 %v657
      %677 = vmatprep.subr.bf16.mxu0 0
      %678 = vmatpush1.bf16.msra.mxu0 %v656
      %679 = vmatprep.subr.bf16.mxu0 0
      %680 = vmatpush1.bf16.msra.mxu0 %v655
      %681 = vmatprep.subr.bf16.mxu0 0
      %682 = vmatpush1.bf16.msra.mxu0 %v654
      %683 = vmatprep.subr.bf16.mxu0 0
      %684 = vmatpush1.bf16.msra.mxu0 %v653
      %685 = vmatprep.subr.bf16.mxu0 0
      %686 = vmatpush2.bf16.msra.mxu0 0
      %687 = vmatprep.subr.bf16.mxu0 0
      %688 = vmatpush2.bf16.msra.mxu0 0
      %689 = vmatprep.subr.bf16.mxu0 0
      %690 = vmatpush2.bf16.msra.mxu0 0
      %691 = vmatprep.subr.bf16.mxu0 0
      %692 = vmatpush2.bf16.msra.mxu0 0
      %693 = vmatprep.subr.bf16.mxu0 0
      %694 = vmatpush2.bf16.msra.mxu0 0
      %695 = vmatprep.subr.bf16.mxu0 0
      %696 = vmatpush2.bf16.msra.mxu0 0
      %697 = vmatprep.subr.bf16.mxu0 0
      %698 = vmatpush2.bf16.msra.mxu0 0
      %699 = vmatprep.subr.bf16.mxu0 0
      %700 = vmatpush2.bf16.msra.mxu0 0
      %701 = vmatprep.mubr.bf16.mxu0 0
      %702 = vmatmul.mubr.bf16.gmra.mxu0 %v594
      %v703 = vpop.f32.mrf.mxu0
      %v704 = vadd.f32 %v619, %v703
      %v705 = vpop.f32.mrf.mxu0
      %v706 = vpop.f32.mrf.mxu0
      %v707 = vadd.f32 %v619, %v706
      %v708 = vpop.f32.mrf.mxu0
      %709 = vmatprep.mubr.bf16.mxu0 0
      %710 = vmatmul.mubr.bf16.gmra.mxu0 %v595
      %v711 = vpop.f32.mrf.mxu0
      %v712 = vadd.f32 %v619, %v711
      %v713 = vpop.f32.mrf.mxu0
      %v714 = vpop.f32.mrf.mxu0
      %v715 = vadd.f32 %v619, %v714
      %v716 = vpop.f32.mrf.mxu0
      %717 = vdwg.mxu0
      %v718 = vmax.f32 %v704, 0.0
      %v719 = vmax.f32 %v707, 0.0
      %v720 = vmax.f32 %v712, 0.0
      %v721 = vmax.f32 %v715, 0.0
      %v722 = vpack.c.bf16 %v719, %v718
      %v723 = vpack.c.bf16 %v721, %v720
      %v724 = vld [vmem:[#allocation8] sm:$0xf]
      %v725 = vld [vmem:[#allocation8 + $0x4] sm:$0xf]
      %v726 = vld [vmem:[#allocation8 + $0x8] sm:$0xf]
      %v727 = vld [vmem:[#allocation8 + $0xc] sm:$0xf]
      %v728 = vld [vmem:[#allocation8 + $0x10] sm:$0xf]
      %v729 = vld [vmem:[#allocation8 + $0x14] sm:$0xf]
      %v730 = vld [vmem:[#allocation8 + $0x18] sm:$0xf]
      %v731 = vld [vmem:[#allocation8 + $0x1c] sm:$0xf]
      %v732 = vld [vmem:[#allocation8 + $0x20] sm:$0xf]
      %v733 = vld [vmem:[#allocation8 + $0x24] sm:$0xf]
      %v734 = vld [vmem:[#allocation8 + $0x28] sm:$0xf]
      %v735 = vld [vmem:[#allocation8 + $0x2c] sm:$0xf]
      %v736 = vld [vmem:[#allocation8 + $0x30] sm:$0xf]
      %v737 = vld [vmem:[#allocation8 + $0x34] sm:$0xf]
      %v738 = vld [vmem:[#allocation8 + $0x38] sm:$0xf]
      %v739 = vld [vmem:[#allocation8 + $0x3c] sm:$0xf]
      %v740 = vld [vmem:[%s10] sm:$0x1]
      %v742 = vlaneseq
      %v743 = vshrl.u32 %v742, 7
      %v744 = vsub.s32 0, %v743
      %v745 = vrot.slane %v740, %v744
      %v763 = vunpack.c.l.b16 %v724
      %v764 = vunpack.c.l.b16 %v725
      %v765 = vunpack.c.l.b16 %v726
      %v766 = vunpack.c.l.b16 %v727
      %v767 = vunpack.c.l.b16 %v728
      %v768 = vunpack.c.l.b16 %v729
      %v769 = vunpack.c.l.b16 %v730
      %v770 = vunpack.c.l.b16 %v731
      %v771 = vunpack.c.l.b16 %v732
      %v772 = vunpack.c.l.b16 %v733
      %v773 = vunpack.c.l.b16 %v734
      %v774 = vunpack.c.l.b16 %v735
      %v775 = vunpack.c.l.b16 %v736
      %v776 = vunpack.c.l.b16 %v737
      %v777 = vunpack.c.l.b16 %v738
      %v778 = vunpack.c.l.b16 %v739
      %v779 = vpack.c.b16 %v764, %v763
      %v780 = vpack.c.b16 %v766, %v765
      %v781 = vpack.c.b16 %v768, %v767
      %v782 = vpack.c.b16 %v770, %v769
      %v783 = vpack.c.b16 %v772, %v771
      %v784 = vpack.c.b16 %v774, %v773
      %v785 = vpack.c.b16 %v776, %v775
      %v786 = vpack.c.b16 %v778, %v777
      %795 = vmatprep.subr.bf16.mxu0 0
      %796 = vmatpush1.bf16.msra.mxu0 %v786
      %797 = vmatprep.subr.bf16.mxu0 0
      %798 = vmatpush1.bf16.msra.mxu0 %v785
      %799 = vmatprep.subr.bf16.mxu0 0
      %800 = vmatpush1.bf16.msra.mxu0 %v784
      %801 = vmatprep.subr.bf16.mxu0 0
      %802 = vmatpush1.bf16.msra.mxu0 %v783
      %803 = vmatprep.subr.bf16.mxu0 0
      %804 = vmatpush1.bf16.msra.mxu0 %v782
      %805 = vmatprep.subr.bf16.mxu0 0
      %806 = vmatpush1.bf16.msra.mxu0 %v781
      %807 = vmatprep.subr.bf16.mxu0 0
      %808 = vmatpush1.bf16.msra.mxu0 %v780
      %809 = vmatprep.subr.bf16.mxu0 0
      %810 = vmatpush1.bf16.msra.mxu0 %v779
      %811 = vmatprep.subr.bf16.mxu0 0
      %812 = vmatpush2.bf16.msra.mxu0 0
      %813 = vmatprep.subr.bf16.mxu0 0
      %814 = vmatpush2.bf16.msra.mxu0 0
      %815 = vmatprep.subr.bf16.mxu0 0
      %816 = vmatpush2.bf16.msra.mxu0 0
      %817 = vmatprep.subr.bf16.mxu0 0
      %818 = vmatpush2.bf16.msra.mxu0 0
      %819 = vmatprep.subr.bf16.mxu0 0
      %820 = vmatpush2.bf16.msra.mxu0 0
      %821 = vmatprep.subr.bf16.mxu0 0
      %822 = vmatpush2.bf16.msra.mxu0 0
      %823 = vmatprep.subr.bf16.mxu0 0
      %824 = vmatpush2.bf16.msra.mxu0 0
      %825 = vmatprep.subr.bf16.mxu0 0
      %826 = vmatpush2.bf16.msra.mxu0 0
      %827 = vmatprep.mubr.bf16.mxu0 0
      %828 = vmatmul.mubr.bf16.gmra.mxu0 %v722
      %v829 = vpop.f32.mrf.mxu0
      %v830 = vadd.f32 %v745, %v829
      %v831 = vpop.f32.mrf.mxu0
      %v832 = vpop.f32.mrf.mxu0
      %v833 = vadd.f32 %v745, %v832
      %v834 = vpop.f32.mrf.mxu0
      %835 = vmatprep.mubr.bf16.mxu0 0
      %836 = vmatmul.mubr.bf16.gmra.mxu0 %v723
      %v837 = vpop.f32.mrf.mxu0
      %v838 = vadd.f32 %v745, %v837
      %v839 = vpop.f32.mrf.mxu0
      %v840 = vpop.f32.mrf.mxu0
      %v841 = vadd.f32 %v745, %v840
      %v842 = vpop.f32.mrf.mxu0
      %843 = vdwg.mxu0
      %v844 = vsub.f32 0.0, %v830
      %v845 = vsub.f32 0.0, %v833
      %v846 = vsub.f32 0.0, %v838
      %v847 = vsub.f32 0.0, %v841
      %v848 = vmul.f32 %v844, 1.442695
      %v849 = vpow.pop %v848
      %v850 = vmul.f32 %v845, 1.442695
      %v851 = vpow.pop %v850
      %v852 = vmul.f32 %v846, 1.442695
      %v853 = vpow.pop %v852
      %v854 = vmul.f32 %v847, 1.442695
      %v855 = vpow.pop %v854
      %v856 = vadd.f32 %v849, 1.0
      %v857 = vadd.f32 %v851, 1.0
      %v858 = vadd.f32 %v853, 1.0
      %v859 = vadd.f32 %v855, 1.0
      %v860 = vrcp.pop %v856
      %v861 = vrcp.pop %v857
      %v862 = vrcp.pop %v858
      %v863 = vrcp.pop %v859
      %v864 = vmax.f32 %v860, 0.0
      %v865 = vmax.f32 %v861, 0.0
      %v866 = vmax.f32 %v862, 0.0
      %v867 = vmax.f32 %v863, 0.0
      %v868 = vmin.f32 %v864, 1.0
      %v869 = vmin.f32 %v865, 1.0
      %v870 = vmin.f32 %v866, 1.0
      %v871 = vmin.f32 %v867, 1.0
      %872 = vst [vmem:[#allocation9] sm:$0xff] %v868
      %873 = vst [vmem:[#allocation9 + $0x8] sm:$0xff] %v869
      %874 = vst [vmem:[#allocation9 + $0x10] sm:$0xff] %v870
      %875 = vst [vmem:[#allocation9 + $0x18] sm:$0xff] %v871
    $region65: #{forward.3} parent=1 // pred_fallthru
      _
    // Predicated region
    $region66: #{forward.3} parent=1 // pred_check
      _
    $region67: #{forward.3} parent=1 // pred_check_branch
      %877 = sbr.rel (0) target = $region69
    $region68: #{forward.3} parent=1 // pred_region
      %s879 = ssub.s32 512, 512
      %880 = vsyncadd [#allocation5], %s879
      %s881 = sshll.u32 [#allocation9], 4
      %s882 = int_to_ptr.vmem [resolvable:$true] %s881
      %887 = dma.vmem_to_hbm [thread:$0]  %s882, 512, %s11, [#allocation5], 128, 128, 8
    $region69: #{forward.3} parent=1 // pred_fallthru
      _
    // Predicated region
    $region70: #{forward.3} parent=1 // pred_check
      _
    $region71: #{forward.3} parent=1 // pred_check_branch
      %889 = sbr.rel (0) target = $region73
    $region72: #{forward.3} parent=1 // pred_region
      %890 = dma.done [#allocation5], 512
    $region73: #{forward.3} parent=1 // pred_fallthru
      _
    %891 = vsyncpa [#allocation4], 1
    %892 = vsyncpa [#allocation7], 1
    %893 = vsyncpa [#allocation5], 1

</llo_original>
